<compile_context>
chip_gen: v5e
topology: v5e:2x2
jax: 0.10.0
libtpu: 0.0.40
codegen_flags: <defaults>
</compile_context>

<pallas_src>
import functools

import jax
import jax.numpy as jnp
from jax.experimental import pallas as pl
from jax.experimental.pallas import tpu as pltpu

BN_EPS = 1e-5


# ----------------------------------------------------------------------------
# Pallas kernel
# ----------------------------------------------------------------------------
def _cnn_field_evolver_kernel(
    field_ref,                        # [Np, Dp] f32
    nf_ref, nl_ref,                   # [Np, 1]  boundary masks (not-first / not-last)
    live_ref,                         # [1, Np]  live-row mask (excludes row padding)
    w1l_ref, w1c_ref, w1r_ref,        # conv1 taps [Dp, Hp]
    w2l_ref, w2c_ref, w2r_ref,        # conv2 taps [Hp, Hp]
    w3l_ref, w3c_ref, w3r_ref,        # conv3 taps [Hp, Dp]
    b3_ref,                           # [1, Dp]
    g1_ref, be1_ref,                  # [1, Hp]
    g2_ref, be2_ref,                  # [1, Hp]
    wr_ref, br_ref,                   # residual weight.T [Dp, Dp], bias [1, Dp]
    out_ref,                          # [Np, Dp] f32
    *, time_steps, n_live,
):
    f32 = jnp.float32
    n_rows, dp = field_ref.shape
    hp = w1c_ref.shape[1]
    mm_dt = w1c_ref.dtype             # matmul operand dtype (bf16 or f32)
    shift_next = n_rows - 1           # roll by -1  ==  roll by n_rows - 1

    # ---- load all parameters once (hoisted out of the time loop) ----
    w1l, w1c, w1r = w1l_ref[...], w1c_ref[...], w1r_ref[...]
    w2l, w2c, w2r = w2l_ref[...], w2c_ref[...], w2r_ref[...]
    w3l, w3c, w3r = w3l_ref[...], w3c_ref[...], w3r_ref[...]
    g1, be1 = g1_ref[...], be1_ref[...]
    g2, be2 = g2_ref[...], be2_ref[...]
    wres = wr_ref[...]
    bias_out = b3_ref[...] + br_ref[...]     # conv3 bias + residual bias, one add
    ones_live = live_ref[...]                # [1, Np], zero on padded rows
    inv_n = 1.0 / n_live

    # ---- hoist the boundary-mask broadcasts (broadcast_in_dim is not CSE'd) ----
    nf, nl = nf_ref[...], nl_ref[...]
    nf_d = jnp.broadcast_to(nf, (n_rows, dp))
    nl_d = jnp.broadcast_to(nl, (n_rows, dp))
    if hp == dp:
        nf_h, nl_h = nf_d, nl_d
    else:
        nf_h = jnp.broadcast_to(nf, (n_rows, hp))
        nl_h = jnp.broadcast_to(nl, (n_rows, hp))

    def conv3tap(x, wl, wc, wr, nf_b, nl_b):
        # 3-tap "same" conv over the flattened point axis as three accumulating
        # MXU dots (no concatenate, no shift scratch).  Neighbours come from
        # sublane rolls on the XLU; the masks zero the per-sequence boundaries
        # (and the circular wrap rows), matching Conv1d zero padding.
        x_prev = pltpu.roll(x, 1, axis=0) * nf_b            # x[i-1] or 0
        x_next = pltpu.roll(x, shift_next, axis=0) * nl_b   # x[i+1] or 0
        y = jnp.dot(x.astype(mm_dt), wc, preferred_element_type=f32)
        y = y + jnp.dot(x_prev.astype(mm_dt), wl, preferred_element_type=f32)
        y = y + jnp.dot(x_next.astype(mm_dt), wr, preferred_element_type=f32)
        return y

    def bn_relu(x, g, be):
        # Training-mode BatchNorm1d: biased batch stats over all live rows,
        # computed on the MXU with a masked ones-row (two dots, no concat).
        # Single-pass var = E[x^2]-mean^2 is adequate here (conv outputs are
        # near-zero-mean); the clamp guards the subtraction.
        s = jnp.dot(ones_live, x, preferred_element_type=f32) * inv_n        # [1,C]
        ss = jnp.dot(ones_live, x * x, preferred_element_type=f32) * inv_n   # [1,C]
        var = jnp.maximum(ss - s * s, 0.0)
        scale = g * jax.lax.rsqrt(var + BN_EPS)   # fused affine: y = x*scale+shift
        shift = be - s * scale
        return jnp.maximum(x * scale + shift, 0.0)

    def step(fc):
        # conv1/conv2 biases dropped: a bias added before training-mode BN
        # cancels exactly in the mean subtraction.
        x = bn_relu(conv3tap(fc, w1l, w1c, w1r, nf_d, nl_d), g1, be1)
        x = bn_relu(conv3tap(x, w2l, w2c, w2r, nf_h, nl_h), g2, be2)
        x = conv3tap(x, w3l, w3c, w3r, nf_h, nl_h)
        res = jnp.dot(fc.astype(mm_dt), wres, preferred_element_type=f32)
        return fc + res + x + bias_out           # state carried exactly in f32

    fc = field_ref[...].astype(f32)
    fc = jax.lax.fori_loop(0, time_steps, lambda _, f: step(f), fc,
                           unroll=(time_steps <= 4))
    out_ref[...] = fc.astype(out_ref.dtype)


# ----------------------------------------------------------------------------
# Wrapper (layout / padding glue + pallas_call)
# ----------------------------------------------------------------------------
def _round_up(x, m):
    return ((x + m - 1) // m) * m


def _vmem_limit_bytes():
    # Size the scoped-VMEM limit per chip generation (128 MiB on v5e/v6e,
    # 64 MiB on v7x) instead of hard-coding, leaving headroom for Mosaic.
    try:
        cap = int(pltpu.get_tpu_info().vmem_capacity_bytes)
    except Exception:
        cap = 64 * 1024 * 1024
    return max(min(cap - 16 * 1024 * 1024, 100 * 1024 * 1024), 32 * 1024 * 1024)


def cnn_field_evolver(field, grid_points, params, time_steps=1,
                      matmul_dtype=jnp.bfloat16):
    """field: [B, M, D] f32; grid_points: [B, M, P] (unused, as in the module)."""
    del grid_points  # the CNN evolver ignores the spatial grid, like the module
    B, M, D = field.shape
    H = params["conv1_w"].shape[0]
    N = B * M
    Np = _round_up(N, 8)       # sublane-aligned row count
    Dp = _round_up(D, 128)     # lane-dense channel axes
    Hp = _round_up(H, 128)
    f32 = jnp.float32

    def tap(w, k, cip, cop):
        # torch Conv1d weight [Co, Ci, 3]; tap k (0=left, 1=center, 2=right)
        # as a zero-padded [cip, cop] matmul operand.
        t = jnp.asarray(w)[:, :, k].T.astype(f32)          # [Ci, Co]
        t = jnp.pad(t, ((0, cip - t.shape[0]), (0, cop - t.shape[1])))
        return t.astype(matmul_dtype)

    def vec(v, cp):
        v = jnp.asarray(v).reshape(1, -1).astype(f32)
        return jnp.pad(v, ((0, 0), (0, cp - v.shape[1])))

    field_flat = jnp.pad(field.reshape(N, D).astype(f32),
                         ((0, Np - N), (0, Dp - D)))

    # Per-sequence boundary masks and live-row mask (tiny, built once).
    ids = jnp.arange(Np)
    live = ids < N
    not_first = (live & (ids % M != 0)).astype(f32).reshape(Np, 1)
    not_last = (live & ((ids + 1) % M != 0)).astype(f32).reshape(Np, 1)
    live_row = live.astype(f32).reshape(1, Np)

    res_w = jnp.pad(params["res_w"].T.astype(f32),
                    ((0, Dp - D), (0, Dp - D))).astype(matmul_dtype)

    inputs = (
        field_flat, not_first, not_last, live_row,
        tap(params["conv1_w"], 0, Dp, Hp), tap(params["conv1_w"], 1, Dp, Hp),
        tap(params["conv1_w"], 2, Dp, Hp),
        tap(params["conv2_w"], 0, Hp, Hp), tap(params["conv2_w"], 1, Hp, Hp),
        tap(params["conv2_w"], 2, Hp, Hp),
        tap(params["conv3_w"], 0, Hp, Dp), tap(params["conv3_w"], 1, Hp, Dp),
        tap(params["conv3_w"], 2, Hp, Dp),
        vec(params["conv3_b"], Dp),
        vec(params["bn1_g"], Hp), vec(params["bn1_b"], Hp),
        vec(params["bn2_g"], Hp), vec(params["bn2_b"], Hp),
        res_w, vec(params["res_b"], Dp),
    )
    # Note: conv1_b / conv2_b are intentionally not passed — a bias added
    # immediately before training-mode BatchNorm cancels in the normalization.

    out_pad = pl.pallas_call(
        functools.partial(_cnn_field_evolver_kernel,
                          time_steps=int(time_steps), n_live=N),
        out_shape=jax.ShapeDtypeStruct((Np, Dp), f32),
        in_specs=[pl.BlockSpec(memory_space=pltpu.MemorySpace.VMEM)] * len(inputs),
        out_specs=pl.BlockSpec(memory_space=pltpu.MemorySpace.VMEM),
        compiler_params=pltpu.CompilerParams(
            vmem_limit_bytes=_vmem_limit_bytes()),
    )(*inputs)
    return out_pad[:N, :D].reshape(B, M, D)


# ----------------------------------------------------------------------------
# Deterministic parameter init (shapes from the module's __init__)
# ----------------------------------------------------------------------------
def init_params(key, embed_dim, hidden_dim):
    ks = jax.random.split(key, 12)

    def u(k, shape, fan_in):
        bound = 1.0 / (fan_in ** 0.5)
        return jax.random.uniform(k, shape, jnp.float32, -bound, bound)

    return {
        "conv1_w": u(ks[0], (hidden_dim, embed_dim, 3), embed_dim * 3),
        "conv1_b": u(ks[1], (hidden_dim,), embed_dim * 3),
        "conv2_w": u(ks[2], (hidden_dim, hidden_dim, 3), hidden_dim * 3),
        "conv2_b": u(ks[3], (hidden_dim,), hidden_dim * 3),
        "conv3_w": u(ks[4], (embed_dim, hidden_dim, 3), hidden_dim * 3),
        "conv3_b": u(ks[5], (embed_dim,), hidden_dim * 3),
        "bn1_g": 1.0 + 0.1 * jax.random.normal(ks[6], (hidden_dim,), jnp.float32),
        "bn1_b": 0.1 * jax.random.normal(ks[7], (hidden_dim,), jnp.float32),
        "bn2_g": 1.0 + 0.1 * jax.random.normal(ks[8], (hidden_dim,), jnp.float32),
        "bn2_b": 0.1 * jax.random.normal(ks[9], (hidden_dim,), jnp.float32),
        "res_w": u(ks[10], (embed_dim, embed_dim), embed_dim),
        "res_b": u(ks[11], (embed_dim,), embed_dim),
    }


# ----------------------------------------------------------------------------
# Pure-JAX reference (mirrors the PyTorch forward in [B, M, D] layout)
# ----------------------------------------------------------------------------
def reference(field, params, time_steps):
    prec = jax.lax.Precision.HIGHEST

    def conv(x, w, b):  # x [B, M, Ci]; w torch-layout [Co, Ci, 3]
        xp = jnp.pad(x, ((0, 0), (1, 1), (0, 0)))
        y = (jnp.einsum("bmi,oi->bmo", xp[:, :-2], w[:, :, 0], precision=prec)
             + jnp.einsum("bmi,oi->bmo", xp[:, 1:-1], w[:, :, 1], precision=prec)
             + jnp.einsum("bmi,oi->bmo", xp[:, 2:], w[:, :, 2], precision=prec))
        return y + b

    def bn_relu(x, g, beta):
        mean = x.mean(axis=(0, 1), keepdims=True)
        var = ((x - mean) ** 2).mean(axis=(0, 1), keepdims=True)
        return jnp.maximum((x - mean) / jnp.sqrt(var + BN_EPS) * g + beta, 0.0)

    fc = field
    for _ in range(time_steps):
        x = bn_relu(conv(fc, params["conv1_w"], params["conv1_b"]),
                    params["bn1_g"], params["bn1_b"])
        x = bn_relu(conv(x, params["conv2_w"], params["conv2_b"]),
                    params["bn2_g"], params["bn2_b"])
        x = conv(x, params["conv3_w"], params["conv3_b"])
        res = jnp.einsum("bmi,oi->bmo", fc, params["res_w"], precision=prec)
        fc = fc + (res + params["res_b"]) + x
    return fc


if __name__ == "__main__":
    B, M, D, H, P = 2, 16, 8, 32, 3
    time_steps = 2

    key = jax.random.PRNGKey(0)
    k_field, k_grid, k_params = jax.random.split(key, 3)
    field = jax.random.normal(k_field, (B, M, D), jnp.float32)
    grid_points = jax.random.uniform(k_grid, (B, M, P), jnp.float32)
    params = init_params(k_params, D, H)

    ref = jax.block_until_ready(reference(field, params, time_steps))

    # f32 matmul operands: near-exact match against the reference.
    out_f32 = jax.block_until_ready(
        cnn_field_evolver(field, grid_points, params, time_steps=time_steps,
                          matmul_dtype=jnp.float32))
    assert out_f32.shape == (B, M, D), out_f32.shape
    err_f32 = float(jnp.max(jnp.abs(out_f32 - ref)))
    assert jnp.allclose(out_f32, ref, rtol=1e-2, atol=1e-2), err_f32

    # bf16 matmul operands (f32 accumulation, f32 state carry): the fast path
    # recommended for v6e/v7x MXUs; looser tolerance reflects bf16 rounding.
    out_bf16 = jax.block_until_ready(
        cnn_field_evolver(field, grid_points, params, time_steps=time_steps,
                          matmul_dtype=jnp.bfloat16))
    err_bf16 = float(jnp.max(jnp.abs(out_bf16 - ref)))
    assert jnp.allclose(out_bf16, ref, rtol=5e-2, atol=5e-2), err_bf16

    print("KERNEL_OK")
</pallas_src>

<mosaic_0001>
module attributes {stable_mosaic.version = 11 : i64} {
  func.func @_cnn_field_evolver_kernel(%arg0: memref<32x128xf32, #tpu.memory_space<vmem>>, %arg1: memref<32x1xf32, #tpu.memory_space<vmem>>, %arg2: memref<32x1xf32, #tpu.memory_space<vmem>>, %arg3: memref<1x32xf32, #tpu.memory_space<vmem>>, %arg4: memref<128x128xf32, #tpu.memory_space<vmem>>, %arg5: memref<128x128xf32, #tpu.memory_space<vmem>>, %arg6: memref<128x128xf32, #tpu.memory_space<vmem>>, %arg7: memref<128x128xf32, #tpu.memory_space<vmem>>, %arg8: memref<128x128xf32, #tpu.memory_space<vmem>>, %arg9: memref<128x128xf32, #tpu.memory_space<vmem>>, %arg10: memref<128x128xf32, #tpu.memory_space<vmem>>, %arg11: memref<128x128xf32, #tpu.memory_space<vmem>>, %arg12: memref<128x128xf32, #tpu.memory_space<vmem>>, %arg13: memref<1x128xf32, #tpu.memory_space<vmem>>, %arg14: memref<1x128xf32, #tpu.memory_space<vmem>>, %arg15: memref<1x128xf32, #tpu.memory_space<vmem>>, %arg16: memref<1x128xf32, #tpu.memory_space<vmem>>, %arg17: memref<1x128xf32, #tpu.memory_space<vmem>>, %arg18: memref<128x128xf32, #tpu.memory_space<vmem>>, %arg19: memref<1x128xf32, #tpu.memory_space<vmem>>, %arg20: memref<32x128xf32, #tpu.memory_space<vmem>>) attributes {dimension_semantics = [], scalar_prefetch = 0 : i64, scratch_operands = 0 : i64, tpu.core_type = #tpu.core_type<tc>} {
    %c0 = arith.constant 0 : index
    %c0_0 = arith.constant 0 : index
    %0 = vector.load %arg4[%c0, %c0_0] : memref<128x128xf32, #tpu.memory_space<vmem>>, vector<128x128xf32>
    %c0_1 = arith.constant 0 : index
    %c0_2 = arith.constant 0 : index
    %1 = vector.load %arg5[%c0_1, %c0_2] : memref<128x128xf32, #tpu.memory_space<vmem>>, vector<128x128xf32>
    %c0_3 = arith.constant 0 : index
    %c0_4 = arith.constant 0 : index
    %2 = vector.load %arg6[%c0_3, %c0_4] : memref<128x128xf32, #tpu.memory_space<vmem>>, vector<128x128xf32>
    %c0_5 = arith.constant 0 : index
    %c0_6 = arith.constant 0 : index
    %3 = vector.load %arg7[%c0_5, %c0_6] : memref<128x128xf32, #tpu.memory_space<vmem>>, vector<128x128xf32>
    %c0_7 = arith.constant 0 : index
    %c0_8 = arith.constant 0 : index
    %4 = vector.load %arg8[%c0_7, %c0_8] : memref<128x128xf32, #tpu.memory_space<vmem>>, vector<128x128xf32>
    %c0_9 = arith.constant 0 : index
    %c0_10 = arith.constant 0 : index
    %5 = vector.load %arg9[%c0_9, %c0_10] : memref<128x128xf32, #tpu.memory_space<vmem>>, vector<128x128xf32>
    %c0_11 = arith.constant 0 : index
    %c0_12 = arith.constant 0 : index
    %6 = vector.load %arg10[%c0_11, %c0_12] : memref<128x128xf32, #tpu.memory_space<vmem>>, vector<128x128xf32>
    %c0_13 = arith.constant 0 : index
    %c0_14 = arith.constant 0 : index
    %7 = vector.load %arg11[%c0_13, %c0_14] : memref<128x128xf32, #tpu.memory_space<vmem>>, vector<128x128xf32>
    %c0_15 = arith.constant 0 : index
    %c0_16 = arith.constant 0 : index
    %8 = vector.load %arg12[%c0_15, %c0_16] : memref<128x128xf32, #tpu.memory_space<vmem>>, vector<128x128xf32>
    %c0_17 = arith.constant 0 : index
    %c0_18 = arith.constant 0 : index
    %9 = vector.load %arg14[%c0_17, %c0_18] : memref<1x128xf32, #tpu.memory_space<vmem>>, vector<1x128xf32>
    %c0_19 = arith.constant 0 : index
    %c0_20 = arith.constant 0 : index
    %10 = vector.load %arg15[%c0_19, %c0_20] : memref<1x128xf32, #tpu.memory_space<vmem>>, vector<1x128xf32>
    %c0_21 = arith.constant 0 : index
    %c0_22 = arith.constant 0 : index
    %11 = vector.load %arg16[%c0_21, %c0_22] : memref<1x128xf32, #tpu.memory_space<vmem>>, vector<1x128xf32>
    %c0_23 = arith.constant 0 : index
    %c0_24 = arith.constant 0 : index
    %12 = vector.load %arg17[%c0_23, %c0_24] : memref<1x128xf32, #tpu.memory_space<vmem>>, vector<1x128xf32>
    %c0_25 = arith.constant 0 : index
    %c0_26 = arith.constant 0 : index
    %13 = vector.load %arg18[%c0_25, %c0_26] : memref<128x128xf32, #tpu.memory_space<vmem>>, vector<128x128xf32>
    %c0_27 = arith.constant 0 : index
    %c0_28 = arith.constant 0 : index
    %14 = vector.load %arg13[%c0_27, %c0_28] : memref<1x128xf32, #tpu.memory_space<vmem>>, vector<1x128xf32>
    %c0_29 = arith.constant 0 : index
    %c0_30 = arith.constant 0 : index
    %15 = vector.load %arg19[%c0_29, %c0_30] : memref<1x128xf32, #tpu.memory_space<vmem>>, vector<1x128xf32>
    %16 = arith.addf %14, %15 : vector<1x128xf32>
    %c0_31 = arith.constant 0 : index
    %c0_32 = arith.constant 0 : index
    %17 = vector.load %arg3[%c0_31, %c0_32] : memref<1x32xf32, #tpu.memory_space<vmem>>, vector<1x32xf32>
    %c0_33 = arith.constant 0 : index
    %c0_34 = arith.constant 0 : index
    %18 = vector.load %arg1[%c0_33, %c0_34] : memref<32x1xf32, #tpu.memory_space<vmem>>, vector<32x1xf32>
    %c0_35 = arith.constant 0 : index
    %c0_36 = arith.constant 0 : index
    %19 = vector.load %arg2[%c0_35, %c0_36] : memref<32x1xf32, #tpu.memory_space<vmem>>, vector<32x1xf32>
    %20 = vector.shape_cast %18 : vector<32x1xf32> to vector<32x1xf32>
    %21 = vector.broadcast %20 : vector<32x1xf32> to vector<32x128xf32>
    %22 = vector.shape_cast %19 : vector<32x1xf32> to vector<32x1xf32>
    %23 = vector.broadcast %22 : vector<32x1xf32> to vector<32x128xf32>
    %c0_37 = arith.constant 0 : index
    %c0_38 = arith.constant 0 : index
    %24 = vector.load %arg0[%c0_37, %c0_38] : memref<32x128xf32, #tpu.memory_space<vmem>>, vector<32x128xf32>
    %c0_i32 = arith.constant 0 : i32
    %c1_i32 = arith.constant 1 : i32
    %25 = tpu.dynamic_rotate %24 by %c1_i32 dim 0 : vector<32x128xf32>, i32 -> vector<32x128xf32>
    %26 = arith.mulf %25, %21 : vector<32x128xf32>
    %c31_i32 = arith.constant 31 : i32
    %27 = tpu.dynamic_rotate %24 by %c31_i32 dim 0 : vector<32x128xf32>, i32 -> vector<32x128xf32>
    %28 = arith.mulf %27, %23 : vector<32x128xf32>
    %cst = arith.constant dense<0.000000e+00> : vector<32x128xf32>
    %29 = tpu.matmul %24, %1, %cst {dimension_numbers = #tpu.dot_dimension_numbers<[1], [0], [0], [1], [0, 0, 1, 1], [], []>} : vector<32x128xf32>, vector<128x128xf32>, vector<32x128xf32> -> vector<32x128xf32>
    %cst_39 = arith.constant dense<0.000000e+00> : vector<32x128xf32>
    %30 = tpu.matmul %26, %0, %cst_39 {dimension_numbers = #tpu.dot_dimension_numbers<[1], [0], [0], [1], [0, 0, 1, 1], [], []>} : vector<32x128xf32>, vector<128x128xf32>, vector<32x128xf32> -> vector<32x128xf32>
    %31 = arith.addf %29, %30 : vector<32x128xf32>
    %cst_40 = arith.constant dense<0.000000e+00> : vector<32x128xf32>
    %32 = tpu.matmul %28, %2, %cst_40 {dimension_numbers = #tpu.dot_dimension_numbers<[1], [0], [0], [1], [0, 0, 1, 1], [], []>} : vector<32x128xf32>, vector<128x128xf32>, vector<32x128xf32> -> vector<32x128xf32>
    %33 = arith.addf %31, %32 : vector<32x128xf32>
    %cst_41 = arith.constant dense<0.000000e+00> : vector<1x128xf32>
    %34 = tpu.matmul %17, %33, %cst_41 {dimension_numbers = #tpu.dot_dimension_numbers<[1], [0], [0], [1], [0, 0, 1, 1], [], []>} : vector<1x32xf32>, vector<32x128xf32>, vector<1x128xf32> -> vector<1x128xf32>
    %cst_42 = arith.constant 3.125000e-02 : f32
    %35 = vector.broadcast %cst_42 : f32 to vector<1x128xf32>
    %36 = arith.mulf %34, %35 : vector<1x128xf32>
    %37 = arith.mulf %33, %33 : vector<32x128xf32>
    %cst_43 = arith.constant dense<0.000000e+00> : vector<1x128xf32>
    %38 = tpu.matmul %17, %37, %cst_43 {dimension_numbers = #tpu.dot_dimension_numbers<[1], [0], [0], [1], [0, 0, 1, 1], [], []>} : vector<1x32xf32>, vector<32x128xf32>, vector<1x128xf32> -> vector<1x128xf32>
    %cst_44 = arith.constant 3.125000e-02 : f32
    %39 = vector.broadcast %cst_44 : f32 to vector<1x128xf32>
    %40 = arith.mulf %38, %39 : vector<1x128xf32>
    %41 = arith.mulf %36, %36 : vector<1x128xf32>
    %42 = arith.subf %40, %41 : vector<1x128xf32>
    %cst_45 = arith.constant 0.000000e+00 : f32
    %43 = vector.broadcast %cst_45 : f32 to vector<1x128xf32>
    %44 = arith.maximumf %42, %43 : vector<1x128xf32>
    %cst_46 = arith.constant 9.99999974E-6 : f32
    %45 = vector.broadcast %cst_46 : f32 to vector<1x128xf32>
    %46 = arith.addf %44, %45 : vector<1x128xf32>
    %47 = math.rsqrt %46 : vector<1x128xf32>
    %48 = arith.mulf %9, %47 : vector<1x128xf32>
    %49 = arith.mulf %36, %48 : vector<1x128xf32>
    %50 = arith.subf %10, %49 : vector<1x128xf32>
    %51 = vector.broadcast %48 : vector<1x128xf32> to vector<32x128xf32>
    %52 = arith.mulf %33, %51 : vector<32x128xf32>
    %53 = vector.broadcast %50 : vector<1x128xf32> to vector<32x128xf32>
    %54 = arith.addf %52, %53 : vector<32x128xf32>
    %cst_47 = arith.constant 0.000000e+00 : f32
    %55 = vector.broadcast %cst_47 : f32 to vector<32x128xf32>
    %56 = arith.maximumf %54, %55 : vector<32x128xf32>
    %c1_i32_48 = arith.constant 1 : i32
    %57 = tpu.dynamic_rotate %56 by %c1_i32_48 dim 0 : vector<32x128xf32>, i32 -> vector<32x128xf32>
    %58 = arith.mulf %57, %21 : vector<32x128xf32>
    %c31_i32_49 = arith.constant 31 : i32
    %59 = tpu.dynamic_rotate %56 by %c31_i32_49 dim 0 : vector<32x128xf32>, i32 -> vector<32x128xf32>
    %60 = arith.mulf %59, %23 : vector<32x128xf32>
    %cst_50 = arith.constant dense<0.000000e+00> : vector<32x128xf32>
    %61 = tpu.matmul %56, %4, %cst_50 {dimension_numbers = #tpu.dot_dimension_numbers<[1], [0], [0], [1], [0, 0, 1, 1], [], []>} : vector<32x128xf32>, vector<128x128xf32>, vector<32x128xf32> -> vector<32x128xf32>
    %cst_51 = arith.constant dense<0.000000e+00> : vector<32x128xf32>
    %62 = tpu.matmul %58, %3, %cst_51 {dimension_numbers = #tpu.dot_dimension_numbers<[1], [0], [0], [1], [0, 0, 1, 1], [], []>} : vector<32x128xf32>, vector<128x128xf32>, vector<32x128xf32> -> vector<32x128xf32>
    %63 = arith.addf %61, %62 : vector<32x128xf32>
    %cst_52 = arith.constant dense<0.000000e+00> : vector<32x128xf32>
    %64 = tpu.matmul %60, %5, %cst_52 {dimension_numbers = #tpu.dot_dimension_numbers<[1], [0], [0], [1], [0, 0, 1, 1], [], []>} : vector<32x128xf32>, vector<128x128xf32>, vector<32x128xf32> -> vector<32x128xf32>
    %65 = arith.addf %63, %64 : vector<32x128xf32>
    %cst_53 = arith.constant dense<0.000000e+00> : vector<1x128xf32>
    %66 = tpu.matmul %17, %65, %cst_53 {dimension_numbers = #tpu.dot_dimension_numbers<[1], [0], [0], [1], [0, 0, 1, 1], [], []>} : vector<1x32xf32>, vector<32x128xf32>, vector<1x128xf32> -> vector<1x128xf32>
    %cst_54 = arith.constant 3.125000e-02 : f32
    %67 = vector.broadcast %cst_54 : f32 to vector<1x128xf32>
    %68 = arith.mulf %66, %67 : vector<1x128xf32>
    %69 = arith.mulf %65, %65 : vector<32x128xf32>
    %cst_55 = arith.constant dense<0.000000e+00> : vector<1x128xf32>
    %70 = tpu.matmul %17, %69, %cst_55 {dimension_numbers = #tpu.dot_dimension_numbers<[1], [0], [0], [1], [0, 0, 1, 1], [], []>} : vector<1x32xf32>, vector<32x128xf32>, vector<1x128xf32> -> vector<1x128xf32>
    %cst_56 = arith.constant 3.125000e-02 : f32
    %71 = vector.broadcast %cst_56 : f32 to vector<1x128xf32>
    %72 = arith.mulf %70, %71 : vector<1x128xf32>
    %73 = arith.mulf %68, %68 : vector<1x128xf32>
    %74 = arith.subf %72, %73 : vector<1x128xf32>
    %cst_57 = arith.constant 0.000000e+00 : f32
    %75 = vector.broadcast %cst_57 : f32 to vector<1x128xf32>
    %76 = arith.maximumf %74, %75 : vector<1x128xf32>
    %cst_58 = arith.constant 9.99999974E-6 : f32
    %77 = vector.broadcast %cst_58 : f32 to vector<1x128xf32>
    %78 = arith.addf %76, %77 : vector<1x128xf32>
    %79 = math.rsqrt %78 : vector<1x128xf32>
    %80 = arith.mulf %11, %79 : vector<1x128xf32>
    %81 = arith.mulf %68, %80 : vector<1x128xf32>
    %82 = arith.subf %12, %81 : vector<1x128xf32>
    %83 = vector.broadcast %80 : vector<1x128xf32> to vector<32x128xf32>
    %84 = arith.mulf %65, %83 : vector<32x128xf32>
    %85 = vector.broadcast %82 : vector<1x128xf32> to vector<32x128xf32>
    %86 = arith.addf %84, %85 : vector<32x128xf32>
    %cst_59 = arith.constant 0.000000e+00 : f32
    %87 = vector.broadcast %cst_59 : f32 to vector<32x128xf32>
    %88 = arith.maximumf %86, %87 : vector<32x128xf32>
    %c1_i32_60 = arith.constant 1 : i32
    %89 = tpu.dynamic_rotate %88 by %c1_i32_60 dim 0 : vector<32x128xf32>, i32 -> vector<32x128xf32>
    %90 = arith.mulf %89, %21 : vector<32x128xf32>
    %c31_i32_61 = arith.constant 31 : i32
    %91 = tpu.dynamic_rotate %88 by %c31_i32_61 dim 0 : vector<32x128xf32>, i32 -> vector<32x128xf32>
    %92 = arith.mulf %91, %23 : vector<32x128xf32>
    %cst_62 = arith.constant dense<0.000000e+00> : vector<32x128xf32>
    %93 = tpu.matmul %88, %7, %cst_62 {dimension_numbers = #tpu.dot_dimension_numbers<[1], [0], [0], [1], [0, 0, 1, 1], [], []>} : vector<32x128xf32>, vector<128x128xf32>, vector<32x128xf32> -> vector<32x128xf32>
    %cst_63 = arith.constant dense<0.000000e+00> : vector<32x128xf32>
    %94 = tpu.matmul %90, %6, %cst_63 {dimension_numbers = #tpu.dot_dimension_numbers<[1], [0], [0], [1], [0, 0, 1, 1], [], []>} : vector<32x128xf32>, vector<128x128xf32>, vector<32x128xf32> -> vector<32x128xf32>
    %95 = arith.addf %93, %94 : vector<32x128xf32>
    %cst_64 = arith.constant dense<0.000000e+00> : vector<32x128xf32>
    %96 = tpu.matmul %92, %8, %cst_64 {dimension_numbers = #tpu.dot_dimension_numbers<[1], [0], [0], [1], [0, 0, 1, 1], [], []>} : vector<32x128xf32>, vector<128x128xf32>, vector<32x128xf32> -> vector<32x128xf32>
    %97 = arith.addf %95, %96 : vector<32x128xf32>
    %cst_65 = arith.constant dense<0.000000e+00> : vector<32x128xf32>
    %98 = tpu.matmul %24, %13, %cst_65 {dimension_numbers = #tpu.dot_dimension_numbers<[1], [0], [0], [1], [0, 0, 1, 1], [], []>} : vector<32x128xf32>, vector<128x128xf32>, vector<32x128xf32> -> vector<32x128xf32>
    %99 = arith.addf %24, %98 : vector<32x128xf32>
    %100 = arith.addf %99, %97 : vector<32x128xf32>
    %101 = vector.broadcast %16 : vector<1x128xf32> to vector<32x128xf32>
    %102 = arith.addf %100, %101 : vector<32x128xf32>
    %c1_i32_66 = arith.constant 1 : i32
    %c1_i32_67 = arith.constant 1 : i32
    %103 = tpu.dynamic_rotate %102 by %c1_i32_67 dim 0 : vector<32x128xf32>, i32 -> vector<32x128xf32>
    %104 = arith.mulf %103, %21 : vector<32x128xf32>
    %c31_i32_68 = arith.constant 31 : i32
    %105 = tpu.dynamic_rotate %102 by %c31_i32_68 dim 0 : vector<32x128xf32>, i32 -> vector<32x128xf32>
    %106 = arith.mulf %105, %23 : vector<32x128xf32>
    %cst_69 = arith.constant dense<0.000000e+00> : vector<32x128xf32>
    %107 = tpu.matmul %102, %1, %cst_69 {dimension_numbers = #tpu.dot_dimension_numbers<[1], [0], [0], [1], [0, 0, 1, 1], [], []>} : vector<32x128xf32>, vector<128x128xf32>, vector<32x128xf32> -> vector<32x128xf32>
    %cst_70 = arith.constant dense<0.000000e+00> : vector<32x128xf32>
    %108 = tpu.matmul %104, %0, %cst_70 {dimension_numbers = #tpu.dot_dimension_numbers<[1], [0], [0], [1], [0, 0, 1, 1], [], []>} : vector<32x128xf32>, vector<128x128xf32>, vector<32x128xf32> -> vector<32x128xf32>
    %109 = arith.addf %107, %108 : vector<32x128xf32>
    %cst_71 = arith.constant dense<0.000000e+00> : vector<32x128xf32>
    %110 = tpu.matmul %106, %2, %cst_71 {dimension_numbers = #tpu.dot_dimension_numbers<[1], [0], [0], [1], [0, 0, 1, 1], [], []>} : vector<32x128xf32>, vector<128x128xf32>, vector<32x128xf32> -> vector<32x128xf32>
    %111 = arith.addf %109, %110 : vector<32x128xf32>
    %cst_72 = arith.constant dense<0.000000e+00> : vector<1x128xf32>
    %112 = tpu.matmul %17, %111, %cst_72 {dimension_numbers = #tpu.dot_dimension_numbers<[1], [0], [0], [1], [0, 0, 1, 1], [], []>} : vector<1x32xf32>, vector<32x128xf32>, vector<1x128xf32> -> vector<1x128xf32>
    %cst_73 = arith.constant 3.125000e-02 : f32
    %113 = vector.broadcast %cst_73 : f32 to vector<1x128xf32>
    %114 = arith.mulf %112, %113 : vector<1x128xf32>
    %115 = arith.mulf %111, %111 : vector<32x128xf32>
    %cst_74 = arith.constant dense<0.000000e+00> : vector<1x128xf32>
    %116 = tpu.matmul %17, %115, %cst_74 {dimension_numbers = #tpu.dot_dimension_numbers<[1], [0], [0], [1], [0, 0, 1, 1], [], []>} : vector<1x32xf32>, vector<32x128xf32>, vector<1x128xf32> -> vector<1x128xf32>
    %cst_75 = arith.constant 3.125000e-02 : f32
    %117 = vector.broadcast %cst_75 : f32 to vector<1x128xf32>
    %118 = arith.mulf %116, %117 : vector<1x128xf32>
    %119 = arith.mulf %114, %114 : vector<1x128xf32>
    %120 = arith.subf %118, %119 : vector<1x128xf32>
    %cst_76 = arith.constant 0.000000e+00 : f32
    %121 = vector.broadcast %cst_76 : f32 to vector<1x128xf32>
    %122 = arith.maximumf %120, %121 : vector<1x128xf32>
    %cst_77 = arith.constant 9.99999974E-6 : f32
    %123 = vector.broadcast %cst_77 : f32 to vector<1x128xf32>
    %124 = arith.addf %122, %123 : vector<1x128xf32>
    %125 = math.rsqrt %124 : vector<1x128xf32>
    %126 = arith.mulf %9, %125 : vector<1x128xf32>
    %127 = arith.mulf %114, %126 : vector<1x128xf32>
    %128 = arith.subf %10, %127 : vector<1x128xf32>
    %129 = vector.broadcast %126 : vector<1x128xf32> to vector<32x128xf32>
    %130 = arith.mulf %111, %129 : vector<32x128xf32>
    %131 = vector.broadcast %128 : vector<1x128xf32> to vector<32x128xf32>
    %132 = arith.addf %130, %131 : vector<32x128xf32>
    %cst_78 = arith.constant 0.000000e+00 : f32
    %133 = vector.broadcast %cst_78 : f32 to vector<32x128xf32>
    %134 = arith.maximumf %132, %133 : vector<32x128xf32>
    %c1_i32_79 = arith.constant 1 : i32
    %135 = tpu.dynamic_rotate %134 by %c1_i32_79 dim 0 : vector<32x128xf32>, i32 -> vector<32x128xf32>
    %136 = arith.mulf %135, %21 : vector<32x128xf32>
    %c31_i32_80 = arith.constant 31 : i32
    %137 = tpu.dynamic_rotate %134 by %c31_i32_80 dim 0 : vector<32x128xf32>, i32 -> vector<32x128xf32>
    %138 = arith.mulf %137, %23 : vector<32x128xf32>
    %cst_81 = arith.constant dense<0.000000e+00> : vector<32x128xf32>
    %139 = tpu.matmul %134, %4, %cst_81 {dimension_numbers = #tpu.dot_dimension_numbers<[1], [0], [0], [1], [0, 0, 1, 1], [], []>} : vector<32x128xf32>, vector<128x128xf32>, vector<32x128xf32> -> vector<32x128xf32>
    %cst_82 = arith.constant dense<0.000000e+00> : vector<32x128xf32>
    %140 = tpu.matmul %136, %3, %cst_82 {dimension_numbers = #tpu.dot_dimension_numbers<[1], [0], [0], [1], [0, 0, 1, 1], [], []>} : vector<32x128xf32>, vector<128x128xf32>, vector<32x128xf32> -> vector<32x128xf32>
    %141 = arith.addf %139, %140 : vector<32x128xf32>
    %cst_83 = arith.constant dense<0.000000e+00> : vector<32x128xf32>
    %142 = tpu.matmul %138, %5, %cst_83 {dimension_numbers = #tpu.dot_dimension_numbers<[1], [0], [0], [1], [0, 0, 1, 1], [], []>} : vector<32x128xf32>, vector<128x128xf32>, vector<32x128xf32> -> vector<32x128xf32>
    %143 = arith.addf %141, %142 : vector<32x128xf32>
    %cst_84 = arith.constant dense<0.000000e+00> : vector<1x128xf32>
    %144 = tpu.matmul %17, %143, %cst_84 {dimension_numbers = #tpu.dot_dimension_numbers<[1], [0], [0], [1], [0, 0, 1, 1], [], []>} : vector<1x32xf32>, vector<32x128xf32>, vector<1x128xf32> -> vector<1x128xf32>
    %cst_85 = arith.constant 3.125000e-02 : f32
    %145 = vector.broadcast %cst_85 : f32 to vector<1x128xf32>
    %146 = arith.mulf %144, %145 : vector<1x128xf32>
    %147 = arith.mulf %143, %143 : vector<32x128xf32>
    %cst_86 = arith.constant dense<0.000000e+00> : vector<1x128xf32>
    %148 = tpu.matmul %17, %147, %cst_86 {dimension_numbers = #tpu.dot_dimension_numbers<[1], [0], [0], [1], [0, 0, 1, 1], [], []>} : vector<1x32xf32>, vector<32x128xf32>, vector<1x128xf32> -> vector<1x128xf32>
    %cst_87 = arith.constant 3.125000e-02 : f32
    %149 = vector.broadcast %cst_87 : f32 to vector<1x128xf32>
    %150 = arith.mulf %148, %149 : vector<1x128xf32>
    %151 = arith.mulf %146, %146 : vector<1x128xf32>
    %152 = arith.subf %150, %151 : vector<1x128xf32>
    %cst_88 = arith.constant 0.000000e+00 : f32
    %153 = vector.broadcast %cst_88 : f32 to vector<1x128xf32>
    %154 = arith.maximumf %152, %153 : vector<1x128xf32>
    %cst_89 = arith.constant 9.99999974E-6 : f32
    %155 = vector.broadcast %cst_89 : f32 to vector<1x128xf32>
    %156 = arith.addf %154, %155 : vector<1x128xf32>
    %157 = math.rsqrt %156 : vector<1x128xf32>
    %158 = arith.mulf %11, %157 : vector<1x128xf32>
    %159 = arith.mulf %146, %158 : vector<1x128xf32>
    %160 = arith.subf %12, %159 : vector<1x128xf32>
    %161 = vector.broadcast %158 : vector<1x128xf32> to vector<32x128xf32>
    %162 = arith.mulf %143, %161 : vector<32x128xf32>
    %163 = vector.broadcast %160 : vector<1x128xf32> to vector<32x128xf32>
    %164 = arith.addf %162, %163 : vector<32x128xf32>
    %cst_90 = arith.constant 0.000000e+00 : f32
    %165 = vector.broadcast %cst_90 : f32 to vector<32x128xf32>
    %166 = arith.maximumf %164, %165 : vector<32x128xf32>
    %c1_i32_91 = arith.constant 1 : i32
    %167 = tpu.dynamic_rotate %166 by %c1_i32_91 dim 0 : vector<32x128xf32>, i32 -> vector<32x128xf32>
    %168 = arith.mulf %167, %21 : vector<32x128xf32>
    %c31_i32_92 = arith.constant 31 : i32
    %169 = tpu.dynamic_rotate %166 by %c31_i32_92 dim 0 : vector<32x128xf32>, i32 -> vector<32x128xf32>
    %170 = arith.mulf %169, %23 : vector<32x128xf32>
    %cst_93 = arith.constant dense<0.000000e+00> : vector<32x128xf32>
    %171 = tpu.matmul %166, %7, %cst_93 {dimension_numbers = #tpu.dot_dimension_numbers<[1], [0], [0], [1], [0, 0, 1, 1], [], []>} : vector<32x128xf32>, vector<128x128xf32>, vector<32x128xf32> -> vector<32x128xf32>
    %cst_94 = arith.constant dense<0.000000e+00> : vector<32x128xf32>
    %172 = tpu.matmul %168, %6, %cst_94 {dimension_numbers = #tpu.dot_dimension_numbers<[1], [0], [0], [1], [0, 0, 1, 1], [], []>} : vector<32x128xf32>, vector<128x128xf32>, vector<32x128xf32> -> vector<32x128xf32>
    %173 = arith.addf %171, %172 : vector<32x128xf32>
    %cst_95 = arith.constant dense<0.000000e+00> : vector<32x128xf32>
    %174 = tpu.matmul %170, %8, %cst_95 {dimension_numbers = #tpu.dot_dimension_numbers<[1], [0], [0], [1], [0, 0, 1, 1], [], []>} : vector<32x128xf32>, vector<128x128xf32>, vector<32x128xf32> -> vector<32x128xf32>
    %175 = arith.addf %173, %174 : vector<32x128xf32>
    %cst_96 = arith.constant dense<0.000000e+00> : vector<32x128xf32>
    %176 = tpu.matmul %102, %13, %cst_96 {dimension_numbers = #tpu.dot_dimension_numbers<[1], [0], [0], [1], [0, 0, 1, 1], [], []>} : vector<32x128xf32>, vector<128x128xf32>, vector<32x128xf32> -> vector<32x128xf32>
    %177 = arith.addf %102, %176 : vector<32x128xf32>
    %178 = arith.addf %177, %175 : vector<32x128xf32>
    %179 = vector.broadcast %16 : vector<1x128xf32> to vector<32x128xf32>
    %180 = arith.addf %178, %179 : vector<32x128xf32>
    %c0_97 = arith.constant 0 : index
    %c0_98 = arith.constant 0 : index
    %181 = vector.load %arg20[%c0_97, %c0_98] : memref<32x128xf32, #tpu.memory_space<vmem>>, vector<32x128xf32>
    tpu.vector_store %arg20[%c0_97, %c0_98], %180 {strides = array<i32>} : memref<32x128xf32, #tpu.memory_space<vmem>>, vector<32x128xf32>,
    return
  }
}

</mosaic_0001>

<llo_original>
// kernel: tpu_custom_call.1
$region0: #{tpu_custom_call.1}
  #allocation0 [shape = 'u32[]', space=smem, size = 0x4, offset = 0x4, fixed_abs, tag = 'smem constant byte address 0x4 - core index']
  #allocation1 [shape = 'u32[72,128]{1,0:T(1,128)}', space=vmem, size = 0x9000, scoped, tag = 'internal scratch']
  %s0 = inlined_call_operand.vmem [shape: f32[32,128], index: 0, kind: input, shape index: {}]
  %s1 = inlined_call_operand.vmem [shape: f32[32,1], index: 1, kind: input, shape index: {}]
  %s2 = inlined_call_operand.vmem [shape: f32[32,1], index: 2, kind: input, shape index: {}]
  %s3 = inlined_call_operand.vmem [shape: f32[1,32], index: 3, kind: input, shape index: {}]
  %s4 = inlined_call_operand.hbm [shape: f32[128,128], index: 4, kind: input, shape index: {}]
  %s5 = inlined_call_operand.hbm [shape: f32[128,128], index: 5, kind: input, shape index: {}]
  %s6 = inlined_call_operand.hbm [shape: f32[128,128], index: 6, kind: input, shape index: {}]
  %s7 = inlined_call_operand.hbm [shape: f32[128,128], index: 7, kind: input, shape index: {}]
  %s8 = inlined_call_operand.hbm [shape: f32[128,128], index: 8, kind: input, shape index: {}]
  %s9 = inlined_call_operand.hbm [shape: f32[128,128], index: 9, kind: input, shape index: {}]
  %s10 = inlined_call_operand.hbm [shape: f32[128,128], index: 10, kind: input, shape index: {}]
  %s11 = inlined_call_operand.hbm [shape: f32[128,128], index: 11, kind: input, shape index: {}]
  %s12 = inlined_call_operand.hbm [shape: f32[128,128], index: 12, kind: input, shape index: {}]
  %s13 = inlined_call_operand.vmem [shape: f32[1,128], index: 13, kind: input, shape index: {}]
  %s14 = inlined_call_operand.vmem [shape: f32[1,128], index: 14, kind: input, shape index: {}]
  %s15 = inlined_call_operand.vmem [shape: f32[1,128], index: 15, kind: input, shape index: {}]
  %s16 = inlined_call_operand.vmem [shape: f32[1,128], index: 16, kind: input, shape index: {}]
  %s17 = inlined_call_operand.vmem [shape: f32[1,128], index: 17, kind: input, shape index: {}]
  %s18 = inlined_call_operand.hbm [shape: f32[128,128], index: 18, kind: input, shape index: {}]
  %s19 = inlined_call_operand.vmem [shape: f32[1,128], index: 19, kind: input, shape index: {}]
  %s20 = inlined_call_operand.hbm [shape: f32[32,128], index: 20, kind: output, shape index: {}]
  %s21 = sld [smem:[#allocation0]]
  $region130: #{tpu_custom_call.1} parent=0
    _
  %s23 = ssub.s32 1, %s21
  %s24 = scalar_select 0, %s23, %s21
  $region1: #{tpu_custom_call.1} parent=0
    #allocation2 [shape = 'u8[65536]{0}', space=vmem, size = 0x10000, scoped, tag = 'input window, operand 4, single buffered']
    #allocation3 [shape = 's32[1]{0}', space=sflag, size = 0x4, scoped, tag = 'scoped memory for tpu_custom_call.1']
    #allocation4 [shape = 's32[1]{0}', space=sflag, size = 0x4, scoped, tag = 'scoped memory for tpu_custom_call.1']
    #allocation5 [shape = 'u8[65536]{0}', space=vmem, size = 0x10000, scoped, tag = 'input window, operand 5, single buffered']
    #allocation6 [shape = 's32[1]{0}', space=sflag, size = 0x4, scoped, tag = 'scoped memory for tpu_custom_call.1']
    #allocation7 [shape = 'u8[65536]{0}', space=vmem, size = 0x10000, scoped, tag = 'input window, operand 6, single buffered']
    #allocation8 [shape = 'u8[65536]{0}', space=vmem, size = 0x10000, scoped, tag = 'input window, operand 7, single buffered']
    #allocation9 [shape = 's32[1]{0}', space=sflag, size = 0x4, scoped, tag = 'scoped memory for tpu_custom_call.1']
    #allocation10 [shape = 'u8[65536]{0}', space=vmem, size = 0x10000, scoped, tag = 'input window, operand 8, single buffered']
    #allocation11 [shape = 'u8[65536]{0}', space=vmem, size = 0x10000, scoped, tag = 'input window, operand 9, single buffered']
    #allocation12 [shape = 's32[1]{0}', space=sflag, size = 0x4, scoped, tag = 'scoped memory for tpu_custom_call.1']
    #allocation13 [shape = 'u8[65536]{0}', space=vmem, size = 0x10000, scoped, tag = 'input window, operand 10, single buffered']
    #allocation14 [shape = 'u8[65536]{0}', space=vmem, size = 0x10000, scoped, tag = 'input window, operand 11, single buffered']
    #allocation15 [shape = 's32[1]{0}', space=sflag, size = 0x4, scoped, tag = 'scoped memory for tpu_custom_call.1']
    #allocation16 [shape = 'u8[65536]{0}', space=vmem, size = 0x10000, scoped, tag = 'input window, operand 12, single buffered']
    #allocation17 [shape = 'u8[65536]{0}', space=vmem, size = 0x10000, scoped, tag = 'input window, operand 18, single buffered']
    #allocation18 [shape = 's32[1]{0}', space=sflag, size = 0x4, scoped, tag = 'scoped memory for tpu_custom_call.1']
    #allocation19 [shape = 'u8[16384]{0}', space=vmem, size = 0x4000, scoped, tag = 'output window, operand 0, single buffered']
    %25 = vsyncpa [#allocation3], 0
    %26 = vsyncpa [#allocation6], 0
    %27 = vsyncpa [#allocation9], 0
    %28 = vsyncpa [#allocation12], 0
    %29 = vsyncpa [#allocation15], 0
    %30 = vsyncpa [#allocation18], 0
    %31 = vsyncpa [#allocation4], 0
    // Predicated region
    $region2: #{tpu_custom_call.1} parent=1 // pred_check
      _
    $region3: #{tpu_custom_call.1} parent=1 // pred_check_branch
      %33 = sbr.rel (0) target = $region5
    $region4: #{tpu_custom_call.1} parent=1 // pred_region
      _
    $region5: #{tpu_custom_call.1} parent=1 // pred_fallthru
      _
    // Predicated region
    $region6: #{tpu_custom_call.1} parent=1 // pred_check
      _
    $region7: #{tpu_custom_call.1} parent=1 // pred_check_branch
      %35 = sbr.rel (0) target = $region9
    $region8: #{tpu_custom_call.1} parent=1 // pred_region
      _
    $region9: #{tpu_custom_call.1} parent=1 // pred_fallthru
      _
    // Predicated region
    $region10: #{tpu_custom_call.1} parent=1 // pred_check
      _
    $region11: #{tpu_custom_call.1} parent=1 // pred_check_branch
      %37 = sbr.rel (0) target = $region13
    $region12: #{tpu_custom_call.1} parent=1 // pred_region
      _
    $region13: #{tpu_custom_call.1} parent=1 // pred_fallthru
      _
    // Predicated region
    $region14: #{tpu_custom_call.1} parent=1 // pred_check
      _
    $region15: #{tpu_custom_call.1} parent=1 // pred_check_branch
      %39 = sbr.rel (0) target = $region17
    $region16: #{tpu_custom_call.1} parent=1 // pred_region
      _
    $region17: #{tpu_custom_call.1} parent=1 // pred_fallthru
      _
    // Predicated region
    $region18: #{tpu_custom_call.1} parent=1 // pred_check
      _
    $region19: #{tpu_custom_call.1} parent=1 // pred_check_branch
      %41 = sbr.rel (0) target = $region21
    $region20: #{tpu_custom_call.1} parent=1 // pred_region
      %43 = vsyncadd [#allocation3], 0
      %s44 = sshll.u32 %s4, 4
      %s45 = int_to_ptr.hbm [resolvable:$true] %s44
      %s46 = sshll.u32 [#allocation2], 4
      %s47 = int_to_ptr.vmem [resolvable:$true] %s46
      %52 = dma.hbm_to_vmem [thread:$0]  %s45, 2048, %s47, [#allocation3], 128, 128, 8
    $region21: #{tpu_custom_call.1} parent=1 // pred_fallthru
      _
    // Predicated region
    $region22: #{tpu_custom_call.1} parent=1 // pred_check
      _
    $region23: #{tpu_custom_call.1} parent=1 // pred_check_branch
      %54 = sbr.rel (0) target = $region25
    $region24: #{tpu_custom_call.1} parent=1 // pred_region
      %56 = vsyncadd [#allocation6], 0
      %s57 = sshll.u32 %s5, 4
      %s58 = int_to_ptr.hbm [resolvable:$true] %s57
      %s59 = sshll.u32 [#allocation5], 4
      %s60 = int_to_ptr.vmem [resolvable:$true] %s59
      %65 = dma.hbm_to_vmem [thread:$0]  %s58, 2048, %s60, [#allocation6], 128, 128, 8
    $region25: #{tpu_custom_call.1} parent=1 // pred_fallthru
      _
    // Predicated region
    $region26: #{tpu_custom_call.1} parent=1 // pred_check
      _
    $region27: #{tpu_custom_call.1} parent=1 // pred_check_branch
      %67 = sbr.rel (0) target = $region29
    $region28: #{tpu_custom_call.1} parent=1 // pred_region
      %69 = vsyncadd [#allocation6], 0
      %s70 = sshll.u32 %s6, 4
      %s71 = int_to_ptr.hbm [resolvable:$true] %s70
      %s72 = sshll.u32 [#allocation7], 4
      %s73 = int_to_ptr.vmem [resolvable:$true] %s72
      %78 = dma.hbm_to_vmem [thread:$0]  %s71, 2048, %s73, [#allocation6], 128, 128, 8
    $region29: #{tpu_custom_call.1} parent=1 // pred_fallthru
      _
    // Predicated region
    $region30: #{tpu_custom_call.1} parent=1 // pred_check
      _
    $region31: #{tpu_custom_call.1} parent=1 // pred_check_branch
      %80 = sbr.rel (0) target = $region33
    $region32: #{tpu_custom_call.1} parent=1 // pred_region
      %82 = vsyncadd [#allocation9], 0
      %s83 = sshll.u32 %s7, 4
      %s84 = int_to_ptr.hbm [resolvable:$true] %s83
      %s85 = sshll.u32 [#allocation8], 4
      %s86 = int_to_ptr.vmem [resolvable:$true] %s85
      %91 = dma.hbm_to_vmem [thread:$0]  %s84, 2048, %s86, [#allocation9], 128, 128, 8
    $region33: #{tpu_custom_call.1} parent=1 // pred_fallthru
      _
    // Predicated region
    $region34: #{tpu_custom_call.1} parent=1 // pred_check
      _
    $region35: #{tpu_custom_call.1} parent=1 // pred_check_branch
      %93 = sbr.rel (0) target = $region37
    $region36: #{tpu_custom_call.1} parent=1 // pred_region
      %95 = vsyncadd [#allocation9], 0
      %s96 = sshll.u32 %s8, 4
      %s97 = int_to_ptr.hbm [resolvable:$true] %s96
      %s98 = sshll.u32 [#allocation10], 4
      %s99 = int_to_ptr.vmem [resolvable:$true] %s98
      %104 = dma.hbm_to_vmem [thread:$0]  %s97, 2048, %s99, [#allocation9], 128, 128, 8
    $region37: #{tpu_custom_call.1} parent=1 // pred_fallthru
      _
    // Predicated region
    $region38: #{tpu_custom_call.1} parent=1 // pred_check
      _
    $region39: #{tpu_custom_call.1} parent=1 // pred_check_branch
      %106 = sbr.rel (0) target = $region41
    $region40: #{tpu_custom_call.1} parent=1 // pred_region
      %108 = vsyncadd [#allocation12], 0
      %s109 = sshll.u32 %s9, 4
      %s110 = int_to_ptr.hbm [resolvable:$true] %s109
      %s111 = sshll.u32 [#allocation11], 4
      %s112 = int_to_ptr.vmem [resolvable:$true] %s111
      %117 = dma.hbm_to_vmem [thread:$0]  %s110, 2048, %s112, [#allocation12], 128, 128, 8
    $region41: #{tpu_custom_call.1} parent=1 // pred_fallthru
      _
    // Predicated region
    $region42: #{tpu_custom_call.1} parent=1 // pred_check
      _
    $region43: #{tpu_custom_call.1} parent=1 // pred_check_branch
      %119 = sbr.rel (0) target = $region45
    $region44: #{tpu_custom_call.1} parent=1 // pred_region
      %121 = vsyncadd [#allocation12], 0
      %s122 = sshll.u32 %s10, 4
      %s123 = int_to_ptr.hbm [resolvable:$true] %s122
      %s124 = sshll.u32 [#allocation13], 4
      %s125 = int_to_ptr.vmem [resolvable:$true] %s124
      %130 = dma.hbm_to_vmem [thread:$0]  %s123, 2048, %s125, [#allocation12], 128, 128, 8
    $region45: #{tpu_custom_call.1} parent=1 // pred_fallthru
      _
    // Predicated region
    $region46: #{tpu_custom_call.1} parent=1 // pred_check
      _
    $region47: #{tpu_custom_call.1} parent=1 // pred_check_branch
      %132 = sbr.rel (0) target = $region49
    $region48: #{tpu_custom_call.1} parent=1 // pred_region
      %134 = vsyncadd [#allocation15], 0
      %s135 = sshll.u32 %s11, 4
      %s136 = int_to_ptr.hbm [resolvable:$true] %s135
      %s137 = sshll.u32 [#allocation14], 4
      %s138 = int_to_ptr.vmem [resolvable:$true] %s137
      %143 = dma.hbm_to_vmem [thread:$0]  %s136, 2048, %s138, [#allocation15], 128, 128, 8
    $region49: #{tpu_custom_call.1} parent=1 // pred_fallthru
      _
    // Predicated region
    $region50: #{tpu_custom_call.1} parent=1 // pred_check
      _
    $region51: #{tpu_custom_call.1} parent=1 // pred_check_branch
      %145 = sbr.rel (0) target = $region53
    $region52: #{tpu_custom_call.1} parent=1 // pred_region
      %147 = vsyncadd [#allocation15], 0
      %s148 = sshll.u32 %s12, 4
      %s149 = int_to_ptr.hbm [resolvable:$true] %s148
      %s150 = sshll.u32 [#allocation16], 4
      %s151 = int_to_ptr.vmem [resolvable:$true] %s150
      %156 = dma.hbm_to_vmem [thread:$0]  %s149, 2048, %s151, [#allocation15], 128, 128, 8
    $region53: #{tpu_custom_call.1} parent=1 // pred_fallthru
      _
    // Predicated region
    $region54: #{tpu_custom_call.1} parent=1 // pred_check
      _
    $region55: #{tpu_custom_call.1} parent=1 // pred_check_branch
      %158 = sbr.rel (0) target = $region57
    $region56: #{tpu_custom_call.1} parent=1 // pred_region
      _
    $region57: #{tpu_custom_call.1} parent=1 // pred_fallthru
      _
    // Predicated region
    $region58: #{tpu_custom_call.1} parent=1 // pred_check
      _
    $region59: #{tpu_custom_call.1} parent=1 // pred_check_branch
      %160 = sbr.rel (0) target = $region61
    $region60: #{tpu_custom_call.1} parent=1 // pred_region
      _
    $region61: #{tpu_custom_call.1} parent=1 // pred_fallthru
      _
    // Predicated region
    $region62: #{tpu_custom_call.1} parent=1 // pred_check
      _
    $region63: #{tpu_custom_call.1} parent=1 // pred_check_branch
      %162 = sbr.rel (0) target = $region65
    $region64: #{tpu_custom_call.1} parent=1 // pred_region
      _
    $region65: #{tpu_custom_call.1} parent=1 // pred_fallthru
      _
    // Predicated region
    $region66: #{tpu_custom_call.1} parent=1 // pred_check
      _
    $region67: #{tpu_custom_call.1} parent=1 // pred_check_branch
      %164 = sbr.rel (0) target = $region69
    $region68: #{tpu_custom_call.1} parent=1 // pred_region
      _
    $region69: #{tpu_custom_call.1} parent=1 // pred_fallthru
      _
    // Predicated region
    $region70: #{tpu_custom_call.1} parent=1 // pred_check
      _
    $region71: #{tpu_custom_call.1} parent=1 // pred_check_branch
      %166 = sbr.rel (0) target = $region73
    $region72: #{tpu_custom_call.1} parent=1 // pred_region
      _
    $region73: #{tpu_custom_call.1} parent=1 // pred_fallthru
      _
    // Predicated region
    $region74: #{tpu_custom_call.1} parent=1 // pred_check
      _
    $region75: #{tpu_custom_call.1} parent=1 // pred_check_branch
      %168 = sbr.rel (0) target = $region77
    $region76: #{tpu_custom_call.1} parent=1 // pred_region
      %170 = vsyncadd [#allocation18], 0
      %s171 = sshll.u32 %s18, 4
      %s172 = int_to_ptr.hbm [resolvable:$true] %s171
      %s173 = sshll.u32 [#allocation17], 4
      %s174 = int_to_ptr.vmem [resolvable:$true] %s173
      %179 = dma.hbm_to_vmem [thread:$0]  %s172, 2048, %s174, [#allocation18], 128, 128, 8
    $region77: #{tpu_custom_call.1} parent=1 // pred_fallthru
      _
    // Predicated region
    $region78: #{tpu_custom_call.1} parent=1 // pred_check
      _
    $region79: #{tpu_custom_call.1} parent=1 // pred_check_branch
      %181 = sbr.rel (0) target = $region81
    $region80: #{tpu_custom_call.1} parent=1 // pred_region
      _
    $region81: #{tpu_custom_call.1} parent=1 // pred_fallthru
      _
    // Predicated region
    $region82: #{tpu_custom_call.1} parent=1 // pred_check
      _
    $region83: #{tpu_custom_call.1} parent=1 // pred_check_branch
      %183 = sbr.rel (0) target = $region85
    $region84: #{tpu_custom_call.1} parent=1 // pred_region
      %185 = dma.done [#allocation3], 2048
    $region85: #{tpu_custom_call.1} parent=1 // pred_fallthru
      _
    // Predicated region
    $region86: #{tpu_custom_call.1} parent=1 // pred_check
      _
    $region87: #{tpu_custom_call.1} parent=1 // pred_check_branch
      %187 = sbr.rel (0) target = $region89
    $region88: #{tpu_custom_call.1} parent=1 // pred_region
      %189 = dma.done [#allocation6], 2048
    $region89: #{tpu_custom_call.1} parent=1 // pred_fallthru
      _
    // Predicated region
    $region90: #{tpu_custom_call.1} parent=1 // pred_check
      _
    $region91: #{tpu_custom_call.1} parent=1 // pred_check_branch
      %191 = sbr.rel (0) target = $region93
    $region92: #{tpu_custom_call.1} parent=1 // pred_region
      %193 = dma.done [#allocation6], 2048
    $region93: #{tpu_custom_call.1} parent=1 // pred_fallthru
      _
    // Predicated region
    $region94: #{tpu_custom_call.1} parent=1 // pred_check
      _
    $region95: #{tpu_custom_call.1} parent=1 // pred_check_branch
      %195 = sbr.rel (0) target = $region97
    $region96: #{tpu_custom_call.1} parent=1 // pred_region
      %197 = dma.done [#allocation9], 2048
    $region97: #{tpu_custom_call.1} parent=1 // pred_fallthru
      _
    // Predicated region
    $region98: #{tpu_custom_call.1} parent=1 // pred_check
      _
    $region99: #{tpu_custom_call.1} parent=1 // pred_check_branch
      %199 = sbr.rel (0) target = $region101
    $region100: #{tpu_custom_call.1} parent=1 // pred_region
      %201 = dma.done [#allocation9], 2048
    $region101: #{tpu_custom_call.1} parent=1 // pred_fallthru
      _
    // Predicated region
    $region102: #{tpu_custom_call.1} parent=1 // pred_check
      _
    $region103: #{tpu_custom_call.1} parent=1 // pred_check_branch
      %203 = sbr.rel (0) target = $region105
    $region104: #{tpu_custom_call.1} parent=1 // pred_region
      %205 = dma.done [#allocation12], 2048
    $region105: #{tpu_custom_call.1} parent=1 // pred_fallthru
      _
    // Predicated region
    $region106: #{tpu_custom_call.1} parent=1 // pred_check
      _
    $region107: #{tpu_custom_call.1} parent=1 // pred_check_branch
      %207 = sbr.rel (0) target = $region109
    $region108: #{tpu_custom_call.1} parent=1 // pred_region
      %209 = dma.done [#allocation12], 2048
    $region109: #{tpu_custom_call.1} parent=1 // pred_fallthru
      _
    // Predicated region
    $region110: #{tpu_custom_call.1} parent=1 // pred_check
      _
    $region111: #{tpu_custom_call.1} parent=1 // pred_check_branch
      %211 = sbr.rel (0) target = $region113
    $region112: #{tpu_custom_call.1} parent=1 // pred_region
      %213 = dma.done [#allocation15], 2048
    $region113: #{tpu_custom_call.1} parent=1 // pred_fallthru
      _
    // Predicated region
    $region114: #{tpu_custom_call.1} parent=1 // pred_check
      _
    $region115: #{tpu_custom_call.1} parent=1 // pred_check_branch
      %215 = sbr.rel (0) target = $region117
    $region116: #{tpu_custom_call.1} parent=1 // pred_region
      %217 = dma.done [#allocation15], 2048
    $region117: #{tpu_custom_call.1} parent=1 // pred_fallthru
      _
    // Predicated region
    $region118: #{tpu_custom_call.1} parent=1 // pred_check
      _
    $region119: #{tpu_custom_call.1} parent=1 // pred_check_branch
      %219 = sbr.rel (0) target = $region121
    $region120: #{tpu_custom_call.1} parent=1 // pred_region
      %221 = dma.done [#allocation18], 2048
    $region121: #{tpu_custom_call.1} parent=1 // pred_fallthru
      _
    %v222 = vld [vmem:[#allocation2] sm:$0xff]
    %v223 = vld [vmem:[#allocation2 + $0x8] sm:$0xff]
    %v224 = vld [vmem:[#allocation2 + $0x10] sm:$0xff]
    %v225 = vld [vmem:[#allocation2 + $0x18] sm:$0xff]
    %v226 = vld [vmem:[#allocation2 + $0x20] sm:$0xff]
    %v227 = vld [vmem:[#allocation2 + $0x28] sm:$0xff]
    %v228 = vld [vmem:[#allocation2 + $0x30] sm:$0xff]
    %v229 = vld [vmem:[#allocation2 + $0x38] sm:$0xff]
    %v230 = vld [vmem:[#allocation2 + $0x40] sm:$0xff]
    %v231 = vld [vmem:[#allocation2 + $0x48] sm:$0xff]
    %v232 = vld [vmem:[#allocation2 + $0x50] sm:$0xff]
    %v233 = vld [vmem:[#allocation2 + $0x58] sm:$0xff]
    %v234 = vld [vmem:[#allocation2 + $0x60] sm:$0xff]
    %v235 = vld [vmem:[#allocation2 + $0x68] sm:$0xff]
    %v236 = vld [vmem:[#allocation2 + $0x70] sm:$0xff]
    %v237 = vld [vmem:[#allocation2 + $0x78] sm:$0xff]
    %v238 = vld [vmem:[#allocation5] sm:$0xff]
    %v239 = vld [vmem:[#allocation5 + $0x8] sm:$0xff]
    %v240 = vld [vmem:[#allocation5 + $0x10] sm:$0xff]
    %v241 = vld [vmem:[#allocation5 + $0x18] sm:$0xff]
    %v242 = vld [vmem:[#allocation5 + $0x20] sm:$0xff]
    %v243 = vld [vmem:[#allocation5 + $0x28] sm:$0xff]
    %v244 = vld [vmem:[#allocation5 + $0x30] sm:$0xff]
    %v245 = vld [vmem:[#allocation5 + $0x38] sm:$0xff]
    %v246 = vld [vmem:[#allocation5 + $0x40] sm:$0xff]
    %v247 = vld [vmem:[#allocation5 + $0x48] sm:$0xff]
    %v248 = vld [vmem:[#allocation5 + $0x50] sm:$0xff]
    %v249 = vld [vmem:[#allocation5 + $0x58] sm:$0xff]
    %v250 = vld [vmem:[#allocation5 + $0x60] sm:$0xff]
    %v251 = vld [vmem:[#allocation5 + $0x68] sm:$0xff]
    %v252 = vld [vmem:[#allocation5 + $0x70] sm:$0xff]
    %v253 = vld [vmem:[#allocation5 + $0x78] sm:$0xff]
    %v254 = vld [vmem:[#allocation7] sm:$0xff]
    %v255 = vld [vmem:[#allocation7 + $0x8] sm:$0xff]
    %v256 = vld [vmem:[#allocation7 + $0x10] sm:$0xff]
    %v257 = vld [vmem:[#allocation7 + $0x18] sm:$0xff]
    %v258 = vld [vmem:[#allocation7 + $0x20] sm:$0xff]
    %v259 = vld [vmem:[#allocation7 + $0x28] sm:$0xff]
    %v260 = vld [vmem:[#allocation7 + $0x30] sm:$0xff]
    %v261 = vld [vmem:[#allocation7 + $0x38] sm:$0xff]
    %v262 = vld [vmem:[#allocation7 + $0x40] sm:$0xff]
    %v263 = vld [vmem:[#allocation7 + $0x48] sm:$0xff]
    %v264 = vld [vmem:[#allocation7 + $0x50] sm:$0xff]
    %v265 = vld [vmem:[#allocation7 + $0x58] sm:$0xff]
    %v266 = vld [vmem:[#allocation7 + $0x60] sm:$0xff]
    %v267 = vld [vmem:[#allocation7 + $0x68] sm:$0xff]
    %v268 = vld [vmem:[#allocation7 + $0x70] sm:$0xff]
    %v269 = vld [vmem:[#allocation7 + $0x78] sm:$0xff]
    %v270 = vld [vmem:[#allocation8] sm:$0xff]
    %v271 = vld [vmem:[#allocation8 + $0x8] sm:$0xff]
    %v272 = vld [vmem:[#allocation8 + $0x10] sm:$0xff]
    %v273 = vld [vmem:[#allocation8 + $0x18] sm:$0xff]
    %v274 = vld [vmem:[#allocation8 + $0x20] sm:$0xff]
    %v275 = vld [vmem:[#allocation8 + $0x28] sm:$0xff]
    %v276 = vld [vmem:[#allocation8 + $0x30] sm:$0xff]
    %v277 = vld [vmem:[#allocation8 + $0x38] sm:$0xff]
    %v278 = vld [vmem:[#allocation8 + $0x40] sm:$0xff]
    %v279 = vld [vmem:[#allocation8 + $0x48] sm:$0xff]
    %v280 = vld [vmem:[#allocation8 + $0x50] sm:$0xff]
    %v281 = vld [vmem:[#allocation8 + $0x58] sm:$0xff]
    %v282 = vld [vmem:[#allocation8 + $0x60] sm:$0xff]
    %v283 = vld [vmem:[#allocation8 + $0x68] sm:$0xff]
    %v284 = vld [vmem:[#allocation8 + $0x70] sm:$0xff]
    %v285 = vld [vmem:[#allocation8 + $0x78] sm:$0xff]
    %v286 = vld [vmem:[#allocation10] sm:$0xff]
    %v287 = vld [vmem:[#allocation10 + $0x8] sm:$0xff]
    %v288 = vld [vmem:[#allocation10 + $0x10] sm:$0xff]
    %v289 = vld [vmem:[#allocation10 + $0x18] sm:$0xff]
    %v290 = vld [vmem:[#allocation10 + $0x20] sm:$0xff]
    %v291 = vld [vmem:[#allocation10 + $0x28] sm:$0xff]
    %v292 = vld [vmem:[#allocation10 + $0x30] sm:$0xff]
    %v293 = vld [vmem:[#allocation10 + $0x38] sm:$0xff]
    %v294 = vld [vmem:[#allocation10 + $0x40] sm:$0xff]
    %v295 = vld [vmem:[#allocation10 + $0x48] sm:$0xff]
    %v296 = vld [vmem:[#allocation10 + $0x50] sm:$0xff]
    %v297 = vld [vmem:[#allocation10 + $0x58] sm:$0xff]
    %v298 = vld [vmem:[#allocation10 + $0x60] sm:$0xff]
    %v299 = vld [vmem:[#allocation10 + $0x68] sm:$0xff]
    %v300 = vld [vmem:[#allocation10 + $0x70] sm:$0xff]
    %v301 = vld [vmem:[#allocation10 + $0x78] sm:$0xff]
    %v302 = vld [vmem:[#allocation11] sm:$0xff]
    %v303 = vld [vmem:[#allocation11 + $0x8] sm:$0xff]
    %v304 = vld [vmem:[#allocation11 + $0x10] sm:$0xff]
    %v305 = vld [vmem:[#allocation11 + $0x18] sm:$0xff]
    %v306 = vld [vmem:[#allocation11 + $0x20] sm:$0xff]
    %v307 = vld [vmem:[#allocation11 + $0x28] sm:$0xff]
    %v308 = vld [vmem:[#allocation11 + $0x30] sm:$0xff]
    %v309 = vld [vmem:[#allocation11 + $0x38] sm:$0xff]
    %v310 = vld [vmem:[#allocation11 + $0x40] sm:$0xff]
    %v311 = vld [vmem:[#allocation11 + $0x48] sm:$0xff]
    %v312 = vld [vmem:[#allocation11 + $0x50] sm:$0xff]
    %v313 = vld [vmem:[#allocation11 + $0x58] sm:$0xff]
    %v314 = vld [vmem:[#allocation11 + $0x60] sm:$0xff]
    %v315 = vld [vmem:[#allocation11 + $0x68] sm:$0xff]
    %v316 = vld [vmem:[#allocation11 + $0x70] sm:$0xff]
    %v317 = vld [vmem:[#allocation11 + $0x78] sm:$0xff]
    %v318 = vld [vmem:[#allocation13] sm:$0xff]
    %v319 = vld [vmem:[#allocation13 + $0x8] sm:$0xff]
    %v320 = vld [vmem:[#allocation13 + $0x10] sm:$0xff]
    %v321 = vld [vmem:[#allocation13 + $0x18] sm:$0xff]
    %v322 = vld [vmem:[#allocation13 + $0x20] sm:$0xff]
    %v323 = vld [vmem:[#allocation13 + $0x28] sm:$0xff]
    %v324 = vld [vmem:[#allocation13 + $0x30] sm:$0xff]
    %v325 = vld [vmem:[#allocation13 + $0x38] sm:$0xff]
    %v326 = vld [vmem:[#allocation13 + $0x40] sm:$0xff]
    %v327 = vld [vmem:[#allocation13 + $0x48] sm:$0xff]
    %v328 = vld [vmem:[#allocation13 + $0x50] sm:$0xff]
    %v329 = vld [vmem:[#allocation13 + $0x58] sm:$0xff]
    %v330 = vld [vmem:[#allocation13 + $0x60] sm:$0xff]
    %v331 = vld [vmem:[#allocation13 + $0x68] sm:$0xff]
    %v332 = vld [vmem:[#allocation13 + $0x70] sm:$0xff]
    %v333 = vld [vmem:[#allocation13 + $0x78] sm:$0xff]
    %v334 = vld [vmem:[#allocation14] sm:$0xff]
    %v335 = vld [vmem:[#allocation14 + $0x8] sm:$0xff]
    %v336 = vld [vmem:[#allocation14 + $0x10] sm:$0xff]
    %v337 = vld [vmem:[#allocation14 + $0x18] sm:$0xff]
    %v338 = vld [vmem:[#allocation14 + $0x20] sm:$0xff]
    %v339 = vld [vmem:[#allocation14 + $0x28] sm:$0xff]
    %v340 = vld [vmem:[#allocation14 + $0x30] sm:$0xff]
    %v341 = vld [vmem:[#allocation14 + $0x38] sm:$0xff]
    %v342 = vld [vmem:[#allocation14 + $0x40] sm:$0xff]
    %v343 = vld [vmem:[#allocation14 + $0x48] sm:$0xff]
    %v344 = vld [vmem:[#allocation14 + $0x50] sm:$0xff]
    %v345 = vld [vmem:[#allocation14 + $0x58] sm:$0xff]
    %v346 = vld [vmem:[#allocation14 + $0x60] sm:$0xff]
    %v347 = vld [vmem:[#allocation14 + $0x68] sm:$0xff]
    %v348 = vld [vmem:[#allocation14 + $0x70] sm:$0xff]
    %v349 = vld [vmem:[#allocation14 + $0x78] sm:$0xff]
    %v350 = vld [vmem:[#allocation16] sm:$0xff]
    %v351 = vld [vmem:[#allocation16 + $0x8] sm:$0xff]
    %v352 = vld [vmem:[#allocation16 + $0x10] sm:$0xff]
    %v353 = vld [vmem:[#allocation16 + $0x18] sm:$0xff]
    %v354 = vld [vmem:[#allocation16 + $0x20] sm:$0xff]
    %v355 = vld [vmem:[#allocation16 + $0x28] sm:$0xff]
    %v356 = vld [vmem:[#allocation16 + $0x30] sm:$0xff]
    %v357 = vld [vmem:[#allocation16 + $0x38] sm:$0xff]
    %v358 = vld [vmem:[#allocation16 + $0x40] sm:$0xff]
    %v359 = vld [vmem:[#allocation16 + $0x48] sm:$0xff]
    %v360 = vld [vmem:[#allocation16 + $0x50] sm:$0xff]
    %v361 = vld [vmem:[#allocation16 + $0x58] sm:$0xff]
    %v362 = vld [vmem:[#allocation16 + $0x60] sm:$0xff]
    %v363 = vld [vmem:[#allocation16 + $0x68] sm:$0xff]
    %v364 = vld [vmem:[#allocation16 + $0x70] sm:$0xff]
    %v365 = vld [vmem:[#allocation16 + $0x78] sm:$0xff]
    %v366 = vld [vmem:[%s14] sm:$0x1]
    %v367 = vld [vmem:[%s15] sm:$0x1]
    %v368 = vld [vmem:[%s16] sm:$0x1]
    %v369 = vld [vmem:[%s17] sm:$0x1]
    %v370 = vld [vmem:[#allocation17] sm:$0xff]
    %v371 = vld [vmem:[#allocation17 + $0x8] sm:$0xff]
    %v372 = vld [vmem:[#allocation17 + $0x10] sm:$0xff]
    %v373 = vld [vmem:[#allocation17 + $0x18] sm:$0xff]
    %v374 = vld [vmem:[#allocation17 + $0x20] sm:$0xff]
    %v375 = vld [vmem:[#allocation17 + $0x28] sm:$0xff]
    %v376 = vld [vmem:[#allocation17 + $0x30] sm:$0xff]
    %v377 = vld [vmem:[#allocation17 + $0x38] sm:$0xff]
    %v378 = vld [vmem:[#allocation17 + $0x40] sm:$0xff]
    %v379 = vld [vmem:[#allocation17 + $0x48] sm:$0xff]
    %v380 = vld [vmem:[#allocation17 + $0x50] sm:$0xff]
    %v381 = vld [vmem:[#allocation17 + $0x58] sm:$0xff]
    %v382 = vld [vmem:[#allocation17 + $0x60] sm:$0xff]
    %v383 = vld [vmem:[#allocation17 + $0x68] sm:$0xff]
    %v384 = vld [vmem:[#allocation17 + $0x70] sm:$0xff]
    %v385 = vld [vmem:[#allocation17 + $0x78] sm:$0xff]
    %v386 = vld [vmem:[%s13] sm:$0x1]
    %v387 = vld [vmem:[%s19] sm:$0x1]
    %v388 = vadd.f32 %v386, %v387
    %v389 = vld [vmem:[%s3] sm:$0x1]
    %v390 = vld [vmem:[%s1] sm:$0xff]
    %v391 = vld [vmem:[%s1 + $0x8] sm:$0xff]
    %v392 = vld [vmem:[%s1 + $0x10] sm:$0xff]
    %v393 = vld [vmem:[%s1 + $0x18] sm:$0xff]
    %v394 = vld [vmem:[%s2] sm:$0xff]
    %v395 = vld [vmem:[%s2 + $0x8] sm:$0xff]
    %v396 = vld [vmem:[%s2 + $0x10] sm:$0xff]
    %v397 = vld [vmem:[%s2 + $0x18] sm:$0xff]
    %399 = vset.pattern.permute.xlu0 0
    %400 = vperm.xlu0 %399, %v390
    %v401 = vpop.permute.xlu0 %400
    %404 = vset.pattern.permute.xlu0 0
    %405 = vperm.xlu0 %404, %v391
    %v406 = vpop.permute.xlu0 %405
    %409 = vset.pattern.permute.xlu0 0
    %410 = vperm.xlu0 %409, %v392
    %v411 = vpop.permute.xlu0 %410
    %414 = vset.pattern.permute.xlu0 0
    %415 = vperm.xlu0 %414, %v393
    %v416 = vpop.permute.xlu0 %415
    %419 = vset.pattern.permute.xlu0 0
    %420 = vperm.xlu0 %419, %v394
    %v421 = vpop.permute.xlu0 %420
    %424 = vset.pattern.permute.xlu0 0
    %425 = vperm.xlu0 %424, %v395
    %v426 = vpop.permute.xlu0 %425
    %429 = vset.pattern.permute.xlu0 0
    %430 = vperm.xlu0 %429, %v396
    %v431 = vpop.permute.xlu0 %430
    %434 = vset.pattern.permute.xlu0 0
    %435 = vperm.xlu0 %434, %v397
    %v436 = vpop.permute.xlu0 %435
    %v438 = vld [vmem:[%s0] sm:$0xff]
    %v439 = vld [vmem:[%s0 + $0x8] sm:$0xff]
    %v440 = vld [vmem:[%s0 + $0x10] sm:$0xff]
    %v441 = vld [vmem:[%s0 + $0x18] sm:$0xff]
    %v442 = vrot.slane %v438, 7
    %v443 = vrot.slane %v439, 7
    %v444 = vrot.slane %v440, 7
    %v445 = vrot.slane %v441, 7
    %v446 = vlaneseq
    %v447 = vshrl.u32 %v446, 7
    %vm448 = vcmp.lt.s32.totalorder %v447, 1
    %v449 = vsel %vm448, %v444, %v445
    %v450 = vsel %vm448, %v443, %v444
    %v451 = vsel %vm448, %v442, %v443
    %v452 = vsel %vm448, %v445, %v442
    %v453 = vmul.f32 %v452, %v401
    %v454 = vmul.f32 %v451, %v406
    %v455 = vmul.f32 %v450, %v411
    %v456 = vmul.f32 %v449, %v416
    %v457 = vrot.slane %v438, 1
    %v458 = vrot.slane %v439, 1
    %v459 = vrot.slane %v440, 1
    %v460 = vrot.slane %v441, 1
    %vm461 = vcmp.lt.s32.totalorder %v447, 7
    %v462 = vsel %vm461, %v459, %v460
    %v463 = vsel %vm461, %v458, %v459
    %v464 = vsel %vm461, %v457, %v458
    %v465 = vsel %vm461, %v460, %v457
    %v466 = vmul.f32 %v464, %v421
    %v467 = vmul.f32 %v463, %v426
    %v468 = vmul.f32 %v462, %v431
    %v469 = vmul.f32 %v465, %v436
    %470 = vmatpush.msra.mxu0 %v237
    %471 = vmatpush.msra.mxu0 %v236
    %472 = vmatpush.msra.mxu0 %v235
    %473 = vmatpush.msra.mxu0 %v234
    %474 = vmatpush.msra.mxu0 %v233
    %475 = vmatpush.msra.mxu0 %v232
    %476 = vmatpush.msra.mxu0 %v231
    %477 = vmatpush.msra.mxu0 %v230
    %478 = vmatpush.msra.mxu0 %v229
    %479 = vmatpush.msra.mxu0 %v228
    %480 = vmatpush.msra.mxu0 %v227
    %481 = vmatpush.msra.mxu0 %v226
    %482 = vmatpush.msra.mxu0 %v225
    %483 = vmatpush.msra.mxu0 %v224
    %484 = vmatpush.msra.mxu0 %v223
    %485 = vmatpush.msra.mxu0 %v222
    %486 = vmatmul.f32.gmra.mxu0 %v453
    %v487 = vpop.f32.mrf.mxu0
    %v488 = vadd.f32 0.0, %v487
    %489 = vmatmul.f32.gmra.mxu0 %v454
    %v490 = vpop.f32.mrf.mxu0
    %v491 = vadd.f32 0.0, %v490
    %492 = vmatmul.f32.gmra.mxu0 %v455
    %v493 = vpop.f32.mrf.mxu0
    %v494 = vadd.f32 0.0, %v493
    %495 = vmatmul.f32.gmra.mxu0 %v456
    %v496 = vpop.f32.mrf.mxu0
    %v497 = vadd.f32 0.0, %v496
    %498 = vdwg.mxu0
    %499 = vmatpush.msra.mxu0 %v253
    %500 = vmatpush.msra.mxu0 %v252
    %501 = vmatpush.msra.mxu0 %v251
    %502 = vmatpush.msra.mxu0 %v250
    %503 = vmatpush.msra.mxu0 %v249
    %504 = vmatpush.msra.mxu0 %v248
    %505 = vmatpush.msra.mxu0 %v247
    %506 = vmatpush.msra.mxu0 %v246
    %507 = vmatpush.msra.mxu0 %v245
    %508 = vmatpush.msra.mxu0 %v244
    %509 = vmatpush.msra.mxu0 %v243
    %510 = vmatpush.msra.mxu0 %v242
    %511 = vmatpush.msra.mxu0 %v241
    %512 = vmatpush.msra.mxu0 %v240
    %513 = vmatpush.msra.mxu0 %v239
    %514 = vmatpush.msra.mxu0 %v238
    %515 = vmatmul.f32.gmra.mxu0 %v438
    %v516 = vpop.f32.mrf.mxu0
    %v517 = vadd.f32 %v488, %v516
    %518 = vmatmul.f32.gmra.mxu0 %v439
    %v519 = vpop.f32.mrf.mxu0
    %v520 = vadd.f32 %v491, %v519
    %521 = vmatmul.f32.gmra.mxu0 %v440
    %v522 = vpop.f32.mrf.mxu0
    %v523 = vadd.f32 %v494, %v522
    %524 = vmatmul.f32.gmra.mxu0 %v441
    %v525 = vpop.f32.mrf.mxu0
    %v526 = vadd.f32 %v497, %v525
    %527 = vdwg.mxu0
    %528 = vmatpush.msra.mxu0 %v269
    %529 = vmatpush.msra.mxu0 %v268
    %530 = vmatpush.msra.mxu0 %v267
    %531 = vmatpush.msra.mxu0 %v266
    %532 = vmatpush.msra.mxu0 %v265
    %533 = vmatpush.msra.mxu0 %v264
    %534 = vmatpush.msra.mxu0 %v263
    %535 = vmatpush.msra.mxu0 %v262
    %536 = vmatpush.msra.mxu0 %v261
    %537 = vmatpush.msra.mxu0 %v260
    %538 = vmatpush.msra.mxu0 %v259
    %539 = vmatpush.msra.mxu0 %v258
    %540 = vmatpush.msra.mxu0 %v257
    %541 = vmatpush.msra.mxu0 %v256
    %542 = vmatpush.msra.mxu0 %v255
    %543 = vmatpush.msra.mxu0 %v254
    %544 = vmatmul.f32.gmra.mxu0 %v466
    %v545 = vpop.f32.mrf.mxu0
    %v546 = vadd.f32 0.0, %v545
    %547 = vmatmul.f32.gmra.mxu0 %v467
    %v548 = vpop.f32.mrf.mxu0
    %v549 = vadd.f32 0.0, %v548
    %550 = vmatmul.f32.gmra.mxu0 %v468
    %v551 = vpop.f32.mrf.mxu0
    %v552 = vadd.f32 0.0, %v551
    %553 = vmatmul.f32.gmra.mxu0 %v469
    %v554 = vpop.f32.mrf.mxu0
    %v555 = vadd.f32 0.0, %v554
    %556 = vdwg.mxu0
    %v557 = vadd.f32 %v517, %v546
    %v558 = vadd.f32 %v520, %v549
    %v559 = vadd.f32 %v523, %v552
    %v560 = vadd.f32 %v526, %v555
    %vm561 = vcmask 261120
    %v563 = vsel %vm561, %v389, 0
    %565 = vmatpush.msra.mxu0 0.0
    %566 = vmatpush.msra.mxu0 0.0
    %567 = vmatpush.msra.mxu0 0.0
    %568 = vmatpush.msra.mxu0 0.0
    %569 = vmatpush.msra.mxu0 0.0
    %570 = vmatpush.msra.mxu0 0.0
    %571 = vmatpush.msra.mxu0 0.0
    %572 = vmatpush.msra.mxu0 0.0
    %573 = vmatpush.msra.mxu0 0.0
    %574 = vmatpush.msra.mxu0 0.0
    %575 = vmatpush.msra.mxu0 0.0
    %576 = vmatpush.msra.mxu0 0.0
    %577 = vmatpush.msra.mxu0 %v560
    %578 = vmatpush.msra.mxu0 %v559
    %579 = vmatpush.msra.mxu0 %v558
    %580 = vmatpush.msra.mxu0 %v557
    %581 = vmatmul.f32.gmra.mxu0 %v563
    %v582 = vpop.f32.mrf.mxu0
    %v583 = vadd.f32 0.0, %v582
    %584 = vdwg.mxu0
    %v585 = vmul.f32 %v583, 0.03125
    %v586 = vmul.f32 %v557, %v557
    %v587 = vmul.f32 %v558, %v558
    %v588 = vmul.f32 %v559, %v559
    %v589 = vmul.f32 %v560, %v560
    %590 = vmatpush.msra.mxu0 0.0
    %591 = vmatpush.msra.mxu0 0.0
    %592 = vmatpush.msra.mxu0 0.0
    %593 = vmatpush.msra.mxu0 0.0
    %594 = vmatpush.msra.mxu0 0.0
    %595 = vmatpush.msra.mxu0 0.0
    %596 = vmatpush.msra.mxu0 0.0
    %597 = vmatpush.msra.mxu0 0.0
    %598 = vmatpush.msra.mxu0 0.0
    %599 = vmatpush.msra.mxu0 0.0
    %600 = vmatpush.msra.mxu0 0.0
    %601 = vmatpush.msra.mxu0 0.0
    %602 = vmatpush.msra.mxu0 %v589
    %603 = vmatpush.msra.mxu0 %v588
    %604 = vmatpush.msra.mxu0 %v587
    %605 = vmatpush.msra.mxu0 %v586
    %606 = vmatmul.f32.gmra.mxu0 %v563
    %v607 = vpop.f32.mrf.mxu0
    %v608 = vadd.f32 0.0, %v607
    %609 = vdwg.mxu0
    %v610 = vmul.f32 %v608, 0.03125
    %v611 = vmul.f32 %v585, %v585
    %v612 = vsub.f32 %v610, %v611
    %v613 = vmax.f32 %v612, 0.0
    %v614 = vadd.f32 %v613, 1e-05
    %v615 = vrsqrt.pop %v614
    %v616 = vmul.f32 %v615, %v614
    %v617 = vmul.f32 %v616, %v615
    %v618 = vmul.f32 0.5, %v617
    %v619 = vsub.f32 1.5, %v618
    %v620 = vmul.f32 %v615, %v619
    %vm621 = vweird.f32 %v614
    %vm622 = vweird.f32 %v615
    %vm623 = vmor %vm621, %vm622
    %v624 = vsel %vm623, %v615, %v620
    %v625 = vmul.f32 %v366, %v624
    %v626 = vmul.f32 %v585, %v625
    %v627 = vsub.f32 %v367, %v626
    %v629 = vperm.slane %v625, 0
    %v631 = vmul.f32 %v557, %v629
    %v632 = vmul.f32 %v558, %v629
    %v633 = vmul.f32 %v559, %v629
    %v634 = vmul.f32 %v560, %v629
    %v636 = vperm.slane %v627, 0
    %v638 = vadd.f32 %v631, %v636
    %v639 = vadd.f32 %v632, %v636
    %v640 = vadd.f32 %v633, %v636
    %v641 = vadd.f32 %v634, %v636
    %v642 = vmax.f32 %v638, 0.0
    %v643 = vmax.f32 %v639, 0.0
    %v644 = vmax.f32 %v640, 0.0
    %v645 = vmax.f32 %v641, 0.0
    %v646 = vrot.slane %v642, 7
    %v647 = vrot.slane %v643, 7
    %v648 = vrot.slane %v644, 7
    %v649 = vrot.slane %v645, 7
    %v650 = vsel %vm448, %v648, %v649
    %v651 = vsel %vm448, %v647, %v648
    %v652 = vsel %vm448, %v646, %v647
    %v653 = vsel %vm448, %v649, %v646
    %v654 = vmul.f32 %v653, %v401
    %v655 = vmul.f32 %v652, %v406
    %v656 = vmul.f32 %v651, %v411
    %v657 = vmul.f32 %v650, %v416
    %v658 = vrot.slane %v642, 1
    %v659 = vrot.slane %v643, 1
    %v660 = vrot.slane %v644, 1
    %v661 = vrot.slane %v645, 1
    %v662 = vsel %vm461, %v660, %v661
    %v663 = vsel %vm461, %v659, %v660
    %v664 = vsel %vm461, %v658, %v659
    %v665 = vsel %vm461, %v661, %v658
    %v666 = vmul.f32 %v664, %v421
    %v667 = vmul.f32 %v663, %v426
    %v668 = vmul.f32 %v662, %v431
    %v669 = vmul.f32 %v665, %v436
    %670 = vmatpush.msra.mxu0 %v285
    %671 = vmatpush.msra.mxu0 %v284
    %672 = vmatpush.msra.mxu0 %v283
    %673 = vmatpush.msra.mxu0 %v282
    %674 = vmatpush.msra.mxu0 %v281
    %675 = vmatpush.msra.mxu0 %v280
    %676 = vmatpush.msra.mxu0 %v279
    %677 = vmatpush.msra.mxu0 %v278
    %678 = vmatpush.msra.mxu0 %v277
    %679 = vmatpush.msra.mxu0 %v276
    %680 = vmatpush.msra.mxu0 %v275
    %681 = vmatpush.msra.mxu0 %v274
    %682 = vmatpush.msra.mxu0 %v273
    %683 = vmatpush.msra.mxu0 %v272
    %684 = vmatpush.msra.mxu0 %v271
    %685 = vmatpush.msra.mxu0 %v270
    %686 = vmatmul.f32.gmra.mxu0 %v654
    %v687 = vpop.f32.mrf.mxu0
    %v688 = vadd.f32 0.0, %v687
    %689 = vmatmul.f32.gmra.mxu0 %v655
    %v690 = vpop.f32.mrf.mxu0
    %v691 = vadd.f32 0.0, %v690
    %692 = vmatmul.f32.gmra.mxu0 %v656
    %v693 = vpop.f32.mrf.mxu0
    %v694 = vadd.f32 0.0, %v693
    %695 = vmatmul.f32.gmra.mxu0 %v657
    %v696 = vpop.f32.mrf.mxu0
    %v697 = vadd.f32 0.0, %v696
    %698 = vdwg.mxu0
    %699 = vmatpush.msra.mxu0 %v301
    %700 = vmatpush.msra.mxu0 %v300
    %701 = vmatpush.msra.mxu0 %v299
    %702 = vmatpush.msra.mxu0 %v298
    %703 = vmatpush.msra.mxu0 %v297
    %704 = vmatpush.msra.mxu0 %v296
    %705 = vmatpush.msra.mxu0 %v295
    %706 = vmatpush.msra.mxu0 %v294
    %707 = vmatpush.msra.mxu0 %v293
    %708 = vmatpush.msra.mxu0 %v292
    %709 = vmatpush.msra.mxu0 %v291
    %710 = vmatpush.msra.mxu0 %v290
    %711 = vmatpush.msra.mxu0 %v289
    %712 = vmatpush.msra.mxu0 %v288
    %713 = vmatpush.msra.mxu0 %v287
    %714 = vmatpush.msra.mxu0 %v286
    %715 = vmatmul.f32.gmra.mxu0 %v642
    %v716 = vpop.f32.mrf.mxu0
    %v717 = vadd.f32 %v688, %v716
    %718 = vmatmul.f32.gmra.mxu0 %v643
    %v719 = vpop.f32.mrf.mxu0
    %v720 = vadd.f32 %v691, %v719
    %721 = vmatmul.f32.gmra.mxu0 %v644
    %v722 = vpop.f32.mrf.mxu0
    %v723 = vadd.f32 %v694, %v722
    %724 = vmatmul.f32.gmra.mxu0 %v645
    %v725 = vpop.f32.mrf.mxu0
    %v726 = vadd.f32 %v697, %v725
    %727 = vdwg.mxu0
    %728 = vmatpush.msra.mxu0 %v317
    %729 = vmatpush.msra.mxu0 %v316
    %730 = vmatpush.msra.mxu0 %v315
    %731 = vmatpush.msra.mxu0 %v314
    %732 = vmatpush.msra.mxu0 %v313
    %733 = vmatpush.msra.mxu0 %v312
    %734 = vmatpush.msra.mxu0 %v311
    %735 = vmatpush.msra.mxu0 %v310
    %736 = vmatpush.msra.mxu0 %v309
    %737 = vmatpush.msra.mxu0 %v308
    %738 = vmatpush.msra.mxu0 %v307
    %739 = vmatpush.msra.mxu0 %v306
    %740 = vmatpush.msra.mxu0 %v305
    %741 = vmatpush.msra.mxu0 %v304
    %742 = vmatpush.msra.mxu0 %v303
    %743 = vmatpush.msra.mxu0 %v302
    %744 = vmatmul.f32.gmra.mxu0 %v666
    %v745 = vpop.f32.mrf.mxu0
    %v746 = vadd.f32 0.0, %v745
    %747 = vmatmul.f32.gmra.mxu0 %v667
    %v748 = vpop.f32.mrf.mxu0
    %v749 = vadd.f32 0.0, %v748
    %750 = vmatmul.f32.gmra.mxu0 %v668
    %v751 = vpop.f32.mrf.mxu0
    %v752 = vadd.f32 0.0, %v751
    %753 = vmatmul.f32.gmra.mxu0 %v669
    %v754 = vpop.f32.mrf.mxu0
    %v755 = vadd.f32 0.0, %v754
    %756 = vdwg.mxu0
    %v757 = vadd.f32 %v717, %v746
    %v758 = vadd.f32 %v720, %v749
    %v759 = vadd.f32 %v723, %v752
    %v760 = vadd.f32 %v726, %v755
    %761 = vmatpush.msra.mxu0 0.0
    %762 = vmatpush.msra.mxu0 0.0
    %763 = vmatpush.msra.mxu0 0.0
    %764 = vmatpush.msra.mxu0 0.0
    %765 = vmatpush.msra.mxu0 0.0
    %766 = vmatpush.msra.mxu0 0.0
    %767 = vmatpush.msra.mxu0 0.0
    %768 = vmatpush.msra.mxu0 0.0
    %769 = vmatpush.msra.mxu0 0.0
    %770 = vmatpush.msra.mxu0 0.0
    %771 = vmatpush.msra.mxu0 0.0
    %772 = vmatpush.msra.mxu0 0.0
    %773 = vmatpush.msra.mxu0 %v760
    %774 = vmatpush.msra.mxu0 %v759
    %775 = vmatpush.msra.mxu0 %v758
    %776 = vmatpush.msra.mxu0 %v757
    %777 = vmatmul.f32.gmra.mxu0 %v563
    %v778 = vpop.f32.mrf.mxu0
    %v779 = vadd.f32 0.0, %v778
    %780 = vdwg.mxu0
    %v781 = vmul.f32 %v779, 0.03125
    %v782 = vmul.f32 %v757, %v757
    %v783 = vmul.f32 %v758, %v758
    %v784 = vmul.f32 %v759, %v759
    %v785 = vmul.f32 %v760, %v760
    %786 = vmatpush.msra.mxu0 0.0
    %787 = vmatpush.msra.mxu0 0.0
    %788 = vmatpush.msra.mxu0 0.0
    %789 = vmatpush.msra.mxu0 0.0
    %790 = vmatpush.msra.mxu0 0.0
    %791 = vmatpush.msra.mxu0 0.0
    %792 = vmatpush.msra.mxu0 0.0
    %793 = vmatpush.msra.mxu0 0.0
    %794 = vmatpush.msra.mxu0 0.0
    %795 = vmatpush.msra.mxu0 0.0
    %796 = vmatpush.msra.mxu0 0.0
    %797 = vmatpush.msra.mxu0 0.0
    %798 = vmatpush.msra.mxu0 %v785
    %799 = vmatpush.msra.mxu0 %v784
    %800 = vmatpush.msra.mxu0 %v783
    %801 = vmatpush.msra.mxu0 %v782
    %802 = vmatmul.f32.gmra.mxu0 %v563
    %v803 = vpop.f32.mrf.mxu0
    %v804 = vadd.f32 0.0, %v803
    %805 = vdwg.mxu0
    %v806 = vmul.f32 %v804, 0.03125
    %v807 = vmul.f32 %v781, %v781
    %v808 = vsub.f32 %v806, %v807
    %v809 = vmax.f32 %v808, 0.0
    %v810 = vadd.f32 %v809, 1e-05
    %v811 = vrsqrt.pop %v810
    %v812 = vmul.f32 %v811, %v810
    %v813 = vmul.f32 %v812, %v811
    %v814 = vmul.f32 0.5, %v813
    %v815 = vsub.f32 1.5, %v814
    %v816 = vmul.f32 %v811, %v815
    %vm817 = vweird.f32 %v810
    %vm818 = vweird.f32 %v811
    %vm819 = vmor %vm817, %vm818
    %v820 = vsel %vm819, %v811, %v816
    %v821 = vmul.f32 %v368, %v820
    %v822 = vmul.f32 %v781, %v821
    %v823 = vsub.f32 %v369, %v822
    %v825 = vperm.slane %v821, 0
    %v827 = vmul.f32 %v757, %v825
    %v828 = vmul.f32 %v758, %v825
    %v829 = vmul.f32 %v759, %v825
    %v830 = vmul.f32 %v760, %v825
    %v832 = vperm.slane %v823, 0
    %v834 = vadd.f32 %v827, %v832
    %v835 = vadd.f32 %v828, %v832
    %v836 = vadd.f32 %v829, %v832
    %v837 = vadd.f32 %v830, %v832
    %v838 = vmax.f32 %v834, 0.0
    %v839 = vmax.f32 %v835, 0.0
    %v840 = vmax.f32 %v836, 0.0
    %v841 = vmax.f32 %v837, 0.0
    %v842 = vrot.slane %v838, 7
    %v843 = vrot.slane %v839, 7
    %v844 = vrot.slane %v840, 7
    %v845 = vrot.slane %v841, 7
    %v846 = vsel %vm448, %v844, %v845
    %v847 = vsel %vm448, %v843, %v844
    %v848 = vsel %vm448, %v842, %v843
    %v849 = vsel %vm448, %v845, %v842
    %v850 = vmul.f32 %v849, %v401
    %v851 = vmul.f32 %v848, %v406
    %v852 = vmul.f32 %v847, %v411
    %v853 = vmul.f32 %v846, %v416
    %v854 = vrot.slane %v838, 1
    %v855 = vrot.slane %v839, 1
    %v856 = vrot.slane %v840, 1
    %v857 = vrot.slane %v841, 1
    %v858 = vsel %vm461, %v856, %v857
    %v859 = vsel %vm461, %v855, %v856
    %v860 = vsel %vm461, %v854, %v855
    %v861 = vsel %vm461, %v857, %v854
    %v862 = vmul.f32 %v860, %v421
    %v863 = vmul.f32 %v859, %v426
    %v864 = vmul.f32 %v858, %v431
    %v865 = vmul.f32 %v861, %v436
    %866 = vmatpush.msra.mxu0 %v333
    %867 = vmatpush.msra.mxu0 %v332
    %868 = vmatpush.msra.mxu0 %v331
    %869 = vmatpush.msra.mxu0 %v330
    %870 = vmatpush.msra.mxu0 %v329
    %871 = vmatpush.msra.mxu0 %v328
    %872 = vmatpush.msra.mxu0 %v327
    %873 = vmatpush.msra.mxu0 %v326
    %874 = vmatpush.msra.mxu0 %v325
    %875 = vmatpush.msra.mxu0 %v324
    %876 = vmatpush.msra.mxu0 %v323
    %877 = vmatpush.msra.mxu0 %v322
    %878 = vmatpush.msra.mxu0 %v321
    %879 = vmatpush.msra.mxu0 %v320
    %880 = vmatpush.msra.mxu0 %v319
    %881 = vmatpush.msra.mxu0 %v318
    %882 = vmatmul.f32.gmra.mxu0 %v850
    %v883 = vpop.f32.mrf.mxu0
    %v884 = vadd.f32 0.0, %v883
    %885 = vmatmul.f32.gmra.mxu0 %v851
    %v886 = vpop.f32.mrf.mxu0
    %v887 = vadd.f32 0.0, %v886
    %888 = vmatmul.f32.gmra.mxu0 %v852
    %v889 = vpop.f32.mrf.mxu0
    %v890 = vadd.f32 0.0, %v889
    %891 = vmatmul.f32.gmra.mxu0 %v853
    %v892 = vpop.f32.mrf.mxu0
    %v893 = vadd.f32 0.0, %v892
    %894 = vdwg.mxu0
    %895 = vmatpush.msra.mxu0 %v349
    %896 = vmatpush.msra.mxu0 %v348
    %897 = vmatpush.msra.mxu0 %v347
    %898 = vmatpush.msra.mxu0 %v346
    %899 = vmatpush.msra.mxu0 %v345
    %900 = vmatpush.msra.mxu0 %v344
    %901 = vmatpush.msra.mxu0 %v343
    %902 = vmatpush.msra.mxu0 %v342
    %903 = vmatpush.msra.mxu0 %v341
    %904 = vmatpush.msra.mxu0 %v340
    %905 = vmatpush.msra.mxu0 %v339
    %906 = vmatpush.msra.mxu0 %v338
    %907 = vmatpush.msra.mxu0 %v337
    %908 = vmatpush.msra.mxu0 %v336
    %909 = vmatpush.msra.mxu0 %v335
    %910 = vmatpush.msra.mxu0 %v334
    %911 = vmatmul.f32.gmra.mxu0 %v838
    %v912 = vpop.f32.mrf.mxu0
    %v913 = vadd.f32 %v884, %v912
    %914 = vmatmul.f32.gmra.mxu0 %v839
    %v915 = vpop.f32.mrf.mxu0
    %v916 = vadd.f32 %v887, %v915
    %917 = vmatmul.f32.gmra.mxu0 %v840
    %v918 = vpop.f32.mrf.mxu0
    %v919 = vadd.f32 %v890, %v918
    %920 = vmatmul.f32.gmra.mxu0 %v841
    %v921 = vpop.f32.mrf.mxu0
    %v922 = vadd.f32 %v893, %v921
    %923 = vdwg.mxu0
    %924 = vmatpush.msra.mxu0 %v365
    %925 = vmatpush.msra.mxu0 %v364
    %926 = vmatpush.msra.mxu0 %v363
    %927 = vmatpush.msra.mxu0 %v362
    %928 = vmatpush.msra.mxu0 %v361
    %929 = vmatpush.msra.mxu0 %v360
    %930 = vmatpush.msra.mxu0 %v359
    %931 = vmatpush.msra.mxu0 %v358
    %932 = vmatpush.msra.mxu0 %v357
    %933 = vmatpush.msra.mxu0 %v356
    %934 = vmatpush.msra.mxu0 %v355
    %935 = vmatpush.msra.mxu0 %v354
    %936 = vmatpush.msra.mxu0 %v353
    %937 = vmatpush.msra.mxu0 %v352
    %938 = vmatpush.msra.mxu0 %v351
    %939 = vmatpush.msra.mxu0 %v350
    %940 = vmatmul.f32.gmra.mxu0 %v862
    %v941 = vpop.f32.mrf.mxu0
    %v942 = vadd.f32 0.0, %v941
    %943 = vmatmul.f32.gmra.mxu0 %v863
    %v944 = vpop.f32.mrf.mxu0
    %v945 = vadd.f32 0.0, %v944
    %946 = vmatmul.f32.gmra.mxu0 %v864
    %v947 = vpop.f32.mrf.mxu0
    %v948 = vadd.f32 0.0, %v947
    %949 = vmatmul.f32.gmra.mxu0 %v865
    %v950 = vpop.f32.mrf.mxu0
    %v951 = vadd.f32 0.0, %v950
    %952 = vdwg.mxu0
    %v953 = vadd.f32 %v913, %v942
    %v954 = vadd.f32 %v916, %v945
    %v955 = vadd.f32 %v919, %v948
    %v956 = vadd.f32 %v922, %v951
    %957 = vmatpush.msra.mxu0 %v385
    %958 = vmatpush.msra.mxu0 %v384
    %959 = vmatpush.msra.mxu0 %v383
    %960 = vmatpush.msra.mxu0 %v382
    %961 = vmatpush.msra.mxu0 %v381
    %962 = vmatpush.msra.mxu0 %v380
    %963 = vmatpush.msra.mxu0 %v379
    %964 = vmatpush.msra.mxu0 %v378
    %965 = vmatpush.msra.mxu0 %v377
    %966 = vmatpush.msra.mxu0 %v376
    %967 = vmatpush.msra.mxu0 %v375
    %968 = vmatpush.msra.mxu0 %v374
    %969 = vmatpush.msra.mxu0 %v373
    %970 = vmatpush.msra.mxu0 %v372
    %971 = vmatpush.msra.mxu0 %v371
    %972 = vmatpush.msra.mxu0 %v370
    %973 = vmatmul.f32.gmra.mxu0 %v438
    %v974 = vpop.f32.mrf.mxu0
    %v975 = vadd.f32 0.0, %v974
    %976 = vmatmul.f32.gmra.mxu0 %v439
    %v977 = vpop.f32.mrf.mxu0
    %v978 = vadd.f32 0.0, %v977
    %979 = vmatmul.f32.gmra.mxu0 %v440
    %v980 = vpop.f32.mrf.mxu0
    %v981 = vadd.f32 0.0, %v980
    %982 = vmatmul.f32.gmra.mxu0 %v441
    %v983 = vpop.f32.mrf.mxu0
    %v984 = vadd.f32 0.0, %v983
    %985 = vdwg.mxu0
    %v986 = vadd.f32 %v438, %v975
    %v987 = vadd.f32 %v439, %v978
    %v988 = vadd.f32 %v440, %v981
    %v989 = vadd.f32 %v441, %v984
    %v990 = vadd.f32 %v986, %v953
    %v991 = vadd.f32 %v987, %v954
    %v992 = vadd.f32 %v988, %v955
    %v993 = vadd.f32 %v989, %v956
    %v995 = vperm.slane %v388, 0
    %v997 = vadd.f32 %v990, %v995
    %v998 = vadd.f32 %v991, %v995
    %v999 = vadd.f32 %v992, %v995
    %v1000 = vadd.f32 %v993, %v995
    %v1001 = vrot.slane %v997, 7
    %v1002 = vrot.slane %v998, 7
    %v1003 = vrot.slane %v999, 7
    %v1004 = vrot.slane %v1000, 7
    %v1005 = vsel %vm448, %v1003, %v1004
    %v1006 = vsel %vm448, %v1002, %v1003
    %v1007 = vsel %vm448, %v1001, %v1002
    %v1008 = vsel %vm448, %v1004, %v1001
    %v1009 = vmul.f32 %v1008, %v401
    %v1010 = vmul.f32 %v1007, %v406
    %v1011 = vmul.f32 %v1006, %v411
    %v1012 = vmul.f32 %v1005, %v416
    %v1013 = vrot.slane %v997, 1
    %v1014 = vrot.slane %v998, 1
    %v1015 = vrot.slane %v999, 1
    %v1016 = vrot.slane %v1000, 1
    %v1017 = vsel %vm461, %v1015, %v1016
    %v1018 = vsel %vm461, %v1014, %v1015
    %v1019 = vsel %vm461, %v1013, %v1014
    %v1020 = vsel %vm461, %v1016, %v1013
    %v1021 = vmul.f32 %v1019, %v421
    %v1022 = vmul.f32 %v1018, %v426
    %v1023 = vmul.f32 %v1017, %v431
    %v1024 = vmul.f32 %v1020, %v436
    %1025 = vmatpush.msra.mxu0 %v237
    %1026 = vmatpush.msra.mxu0 %v236
    %1027 = vmatpush.msra.mxu0 %v235
    %1028 = vmatpush.msra.mxu0 %v234
    %1029 = vmatpush.msra.mxu0 %v233
    %1030 = vmatpush.msra.mxu0 %v232
    %1031 = vmatpush.msra.mxu0 %v231
    %1032 = vmatpush.msra.mxu0 %v230
    %1033 = vmatpush.msra.mxu0 %v229
    %1034 = vmatpush.msra.mxu0 %v228
    %1035 = vmatpush.msra.mxu0 %v227
    %1036 = vmatpush.msra.mxu0 %v226
    %1037 = vmatpush.msra.mxu0 %v225
    %1038 = vmatpush.msra.mxu0 %v224
    %1039 = vmatpush.msra.mxu0 %v223
    %1040 = vmatpush.msra.mxu0 %v222
    %1041 = vmatmul.f32.gmra.mxu0 %v1009
    %v1042 = vpop.f32.mrf.mxu0
    %v1043 = vadd.f32 0.0, %v1042
    %1044 = vmatmul.f32.gmra.mxu0 %v1010
    %v1045 = vpop.f32.mrf.mxu0
    %v1046 = vadd.f32 0.0, %v1045
    %1047 = vmatmul.f32.gmra.mxu0 %v1011
    %v1048 = vpop.f32.mrf.mxu0
    %v1049 = vadd.f32 0.0, %v1048
    %1050 = vmatmul.f32.gmra.mxu0 %v1012
    %v1051 = vpop.f32.mrf.mxu0
    %v1052 = vadd.f32 0.0, %v1051
    %1053 = vdwg.mxu0
    %1054 = vmatpush.msra.mxu0 %v253
    %1055 = vmatpush.msra.mxu0 %v252
    %1056 = vmatpush.msra.mxu0 %v251
    %1057 = vmatpush.msra.mxu0 %v250
    %1058 = vmatpush.msra.mxu0 %v249
    %1059 = vmatpush.msra.mxu0 %v248
    %1060 = vmatpush.msra.mxu0 %v247
    %1061 = vmatpush.msra.mxu0 %v246
    %1062 = vmatpush.msra.mxu0 %v245
    %1063 = vmatpush.msra.mxu0 %v244
    %1064 = vmatpush.msra.mxu0 %v243
    %1065 = vmatpush.msra.mxu0 %v242
    %1066 = vmatpush.msra.mxu0 %v241
    %1067 = vmatpush.msra.mxu0 %v240
    %1068 = vmatpush.msra.mxu0 %v239
    %1069 = vmatpush.msra.mxu0 %v238
    %1070 = vmatmul.f32.gmra.mxu0 %v997
    %v1071 = vpop.f32.mrf.mxu0
    %v1072 = vadd.f32 %v1043, %v1071
    %1073 = vmatmul.f32.gmra.mxu0 %v998
    %v1074 = vpop.f32.mrf.mxu0
    %v1075 = vadd.f32 %v1046, %v1074
    %1076 = vmatmul.f32.gmra.mxu0 %v999
    %v1077 = vpop.f32.mrf.mxu0
    %v1078 = vadd.f32 %v1049, %v1077
    %1079 = vmatmul.f32.gmra.mxu0 %v1000
    %v1080 = vpop.f32.mrf.mxu0
    %v1081 = vadd.f32 %v1052, %v1080
    %1082 = vdwg.mxu0
    %1083 = vmatpush.msra.mxu0 %v269
    %1084 = vmatpush.msra.mxu0 %v268
    %1085 = vmatpush.msra.mxu0 %v267
    %1086 = vmatpush.msra.mxu0 %v266
    %1087 = vmatpush.msra.mxu0 %v265
    %1088 = vmatpush.msra.mxu0 %v264
    %1089 = vmatpush.msra.mxu0 %v263
    %1090 = vmatpush.msra.mxu0 %v262
    %1091 = vmatpush.msra.mxu0 %v261
    %1092 = vmatpush.msra.mxu0 %v260
    %1093 = vmatpush.msra.mxu0 %v259
    %1094 = vmatpush.msra.mxu0 %v258
    %1095 = vmatpush.msra.mxu0 %v257
    %1096 = vmatpush.msra.mxu0 %v256
    %1097 = vmatpush.msra.mxu0 %v255
    %1098 = vmatpush.msra.mxu0 %v254
    %1099 = vmatmul.f32.gmra.mxu0 %v1021
    %v1100 = vpop.f32.mrf.mxu0
    %v1101 = vadd.f32 0.0, %v1100
    %1102 = vmatmul.f32.gmra.mxu0 %v1022
    %v1103 = vpop.f32.mrf.mxu0
    %v1104 = vadd.f32 0.0, %v1103
    %1105 = vmatmul.f32.gmra.mxu0 %v1023
    %v1106 = vpop.f32.mrf.mxu0
    %v1107 = vadd.f32 0.0, %v1106
    %1108 = vmatmul.f32.gmra.mxu0 %v1024
    %v1109 = vpop.f32.mrf.mxu0
    %v1110 = vadd.f32 0.0, %v1109
    %1111 = vdwg.mxu0
    %v1112 = vadd.f32 %v1072, %v1101
    %v1113 = vadd.f32 %v1075, %v1104
    %v1114 = vadd.f32 %v1078, %v1107
    %v1115 = vadd.f32 %v1081, %v1110
    %1116 = vmatpush.msra.mxu0 0.0
    %1117 = vmatpush.msra.mxu0 0.0
    %1118 = vmatpush.msra.mxu0 0.0
    %1119 = vmatpush.msra.mxu0 0.0
    %1120 = vmatpush.msra.mxu0 0.0
    %1121 = vmatpush.msra.mxu0 0.0
    %1122 = vmatpush.msra.mxu0 0.0
    %1123 = vmatpush.msra.mxu0 0.0
    %1124 = vmatpush.msra.mxu0 0.0
    %1125 = vmatpush.msra.mxu0 0.0
    %1126 = vmatpush.msra.mxu0 0.0
    %1127 = vmatpush.msra.mxu0 0.0
    %1128 = vmatpush.msra.mxu0 %v1115
    %1129 = vmatpush.msra.mxu0 %v1114
    %1130 = vmatpush.msra.mxu0 %v1113
    %1131 = vmatpush.msra.mxu0 %v1112
    %1132 = vmatmul.f32.gmra.mxu0 %v563
    %v1133 = vpop.f32.mrf.mxu0
    %v1134 = vadd.f32 0.0, %v1133
    %1135 = vdwg.mxu0
    %v1136 = vmul.f32 %v1134, 0.03125
    %v1137 = vmul.f32 %v1112, %v1112
    %v1138 = vmul.f32 %v1113, %v1113
    %v1139 = vmul.f32 %v1114, %v1114
    %v1140 = vmul.f32 %v1115, %v1115
    %1141 = vmatpush.msra.mxu0 0.0
    %1142 = vmatpush.msra.mxu0 0.0
    %1143 = vmatpush.msra.mxu0 0.0
    %1144 = vmatpush.msra.mxu0 0.0
    %1145 = vmatpush.msra.mxu0 0.0
    %1146 = vmatpush.msra.mxu0 0.0
    %1147 = vmatpush.msra.mxu0 0.0
    %1148 = vmatpush.msra.mxu0 0.0
    %1149 = vmatpush.msra.mxu0 0.0
    %1150 = vmatpush.msra.mxu0 0.0
    %1151 = vmatpush.msra.mxu0 0.0
    %1152 = vmatpush.msra.mxu0 0.0
    %1153 = vmatpush.msra.mxu0 %v1140
    %1154 = vmatpush.msra.mxu0 %v1139
    %1155 = vmatpush.msra.mxu0 %v1138
    %1156 = vmatpush.msra.mxu0 %v1137
    %1157 = vmatmul.f32.gmra.mxu0 %v563
    %v1158 = vpop.f32.mrf.mxu0
    %v1159 = vadd.f32 0.0, %v1158
    %1160 = vdwg.mxu0
    %v1161 = vmul.f32 %v1159, 0.03125
    %v1162 = vmul.f32 %v1136, %v1136
    %v1163 = vsub.f32 %v1161, %v1162
    %v1164 = vmax.f32 %v1163, 0.0
    %v1165 = vadd.f32 %v1164, 1e-05
    %v1166 = vrsqrt.pop %v1165
    %v1167 = vmul.f32 %v1166, %v1165
    %v1168 = vmul.f32 %v1167, %v1166
    %v1169 = vmul.f32 0.5, %v1168
    %v1170 = vsub.f32 1.5, %v1169
    %v1171 = vmul.f32 %v1166, %v1170
    %vm1172 = vweird.f32 %v1165
    %vm1173 = vweird.f32 %v1166
    %vm1174 = vmor %vm1172, %vm1173
    %v1175 = vsel %vm1174, %v1166, %v1171
    %v1176 = vmul.f32 %v366, %v1175
    %v1177 = vmul.f32 %v1136, %v1176
    %v1178 = vsub.f32 %v367, %v1177
    %v1180 = vperm.slane %v1176, 0
    %v1182 = vmul.f32 %v1112, %v1180
    %v1183 = vmul.f32 %v1113, %v1180
    %v1184 = vmul.f32 %v1114, %v1180
    %v1185 = vmul.f32 %v1115, %v1180
    %v1187 = vperm.slane %v1178, 0
    %v1189 = vadd.f32 %v1182, %v1187
    %v1190 = vadd.f32 %v1183, %v1187
    %v1191 = vadd.f32 %v1184, %v1187
    %v1192 = vadd.f32 %v1185, %v1187
    %v1193 = vmax.f32 %v1189, 0.0
    %v1194 = vmax.f32 %v1190, 0.0
    %v1195 = vmax.f32 %v1191, 0.0
    %v1196 = vmax.f32 %v1192, 0.0
    %v1197 = vrot.slane %v1193, 7
    %v1198 = vrot.slane %v1194, 7
    %v1199 = vrot.slane %v1195, 7
    %v1200 = vrot.slane %v1196, 7
    %v1201 = vsel %vm448, %v1199, %v1200
    %v1202 = vsel %vm448, %v1198, %v1199
    %v1203 = vsel %vm448, %v1197, %v1198
    %v1204 = vsel %vm448, %v1200, %v1197
    %v1205 = vmul.f32 %v1204, %v401
    %v1206 = vmul.f32 %v1203, %v406
    %v1207 = vmul.f32 %v1202, %v411
    %v1208 = vmul.f32 %v1201, %v416
    %v1209 = vrot.slane %v1193, 1
    %v1210 = vrot.slane %v1194, 1
    %v1211 = vrot.slane %v1195, 1
    %v1212 = vrot.slane %v1196, 1
    %v1213 = vsel %vm461, %v1211, %v1212
    %v1214 = vsel %vm461, %v1210, %v1211
    %v1215 = vsel %vm461, %v1209, %v1210
    %v1216 = vsel %vm461, %v1212, %v1209
    %v1217 = vmul.f32 %v1215, %v421
    %v1218 = vmul.f32 %v1214, %v426
    %v1219 = vmul.f32 %v1213, %v431
    %v1220 = vmul.f32 %v1216, %v436
    %1221 = vmatpush.msra.mxu0 %v285
    %1222 = vmatpush.msra.mxu0 %v284
    %1223 = vmatpush.msra.mxu0 %v283
    %1224 = vmatpush.msra.mxu0 %v282
    %1225 = vmatpush.msra.mxu0 %v281
    %1226 = vmatpush.msra.mxu0 %v280
    %1227 = vmatpush.msra.mxu0 %v279
    %1228 = vmatpush.msra.mxu0 %v278
    %1229 = vmatpush.msra.mxu0 %v277
    %1230 = vmatpush.msra.mxu0 %v276
    %1231 = vmatpush.msra.mxu0 %v275
    %1232 = vmatpush.msra.mxu0 %v274
    %1233 = vmatpush.msra.mxu0 %v273
    %1234 = vmatpush.msra.mxu0 %v272
    %1235 = vmatpush.msra.mxu0 %v271
    %1236 = vmatpush.msra.mxu0 %v270
    %1237 = vmatmul.f32.gmra.mxu0 %v1205
    %v1238 = vpop.f32.mrf.mxu0
    %v1239 = vadd.f32 0.0, %v1238
    %1240 = vmatmul.f32.gmra.mxu0 %v1206
    %v1241 = vpop.f32.mrf.mxu0
    %v1242 = vadd.f32 0.0, %v1241
    %1243 = vmatmul.f32.gmra.mxu0 %v1207
    %v1244 = vpop.f32.mrf.mxu0
    %v1245 = vadd.f32 0.0, %v1244
    %1246 = vmatmul.f32.gmra.mxu0 %v1208
    %v1247 = vpop.f32.mrf.mxu0
    %v1248 = vadd.f32 0.0, %v1247
    %1249 = vdwg.mxu0
    %1250 = vmatpush.msra.mxu0 %v301
    %1251 = vmatpush.msra.mxu0 %v300
    %1252 = vmatpush.msra.mxu0 %v299
    %1253 = vmatpush.msra.mxu0 %v298
    %1254 = vmatpush.msra.mxu0 %v297
    %1255 = vmatpush.msra.mxu0 %v296
    %1256 = vmatpush.msra.mxu0 %v295
    %1257 = vmatpush.msra.mxu0 %v294
    %1258 = vmatpush.msra.mxu0 %v293
    %1259 = vmatpush.msra.mxu0 %v292
    %1260 = vmatpush.msra.mxu0 %v291
    %1261 = vmatpush.msra.mxu0 %v290
    %1262 = vmatpush.msra.mxu0 %v289
    %1263 = vmatpush.msra.mxu0 %v288
    %1264 = vmatpush.msra.mxu0 %v287
    %1265 = vmatpush.msra.mxu0 %v286
    %1266 = vmatmul.f32.gmra.mxu0 %v1193
    %v1267 = vpop.f32.mrf.mxu0
    %v1268 = vadd.f32 %v1239, %v1267
    %1269 = vmatmul.f32.gmra.mxu0 %v1194
    %v1270 = vpop.f32.mrf.mxu0
    %v1271 = vadd.f32 %v1242, %v1270
    %1272 = vmatmul.f32.gmra.mxu0 %v1195
    %v1273 = vpop.f32.mrf.mxu0
    %v1274 = vadd.f32 %v1245, %v1273
    %1275 = vmatmul.f32.gmra.mxu0 %v1196
    %v1276 = vpop.f32.mrf.mxu0
    %v1277 = vadd.f32 %v1248, %v1276
    %1278 = vdwg.mxu0
    %1279 = vmatpush.msra.mxu0 %v317
    %1280 = vmatpush.msra.mxu0 %v316
    %1281 = vmatpush.msra.mxu0 %v315
    %1282 = vmatpush.msra.mxu0 %v314
    %1283 = vmatpush.msra.mxu0 %v313
    %1284 = vmatpush.msra.mxu0 %v312
    %1285 = vmatpush.msra.mxu0 %v311
    %1286 = vmatpush.msra.mxu0 %v310
    %1287 = vmatpush.msra.mxu0 %v309
    %1288 = vmatpush.msra.mxu0 %v308
    %1289 = vmatpush.msra.mxu0 %v307
    %1290 = vmatpush.msra.mxu0 %v306
    %1291 = vmatpush.msra.mxu0 %v305
    %1292 = vmatpush.msra.mxu0 %v304
    %1293 = vmatpush.msra.mxu0 %v303
    %1294 = vmatpush.msra.mxu0 %v302
    %1295 = vmatmul.f32.gmra.mxu0 %v1217
    %v1296 = vpop.f32.mrf.mxu0
    %v1297 = vadd.f32 0.0, %v1296
    %1298 = vmatmul.f32.gmra.mxu0 %v1218
    %v1299 = vpop.f32.mrf.mxu0
    %v1300 = vadd.f32 0.0, %v1299
    %1301 = vmatmul.f32.gmra.mxu0 %v1219
    %v1302 = vpop.f32.mrf.mxu0
    %v1303 = vadd.f32 0.0, %v1302
    %1304 = vmatmul.f32.gmra.mxu0 %v1220
    %v1305 = vpop.f32.mrf.mxu0
    %v1306 = vadd.f32 0.0, %v1305
    %1307 = vdwg.mxu0
    %v1308 = vadd.f32 %v1268, %v1297
    %v1309 = vadd.f32 %v1271, %v1300
    %v1310 = vadd.f32 %v1274, %v1303
    %v1311 = vadd.f32 %v1277, %v1306
    %1312 = vmatpush.msra.mxu0 0.0
    %1313 = vmatpush.msra.mxu0 0.0
    %1314 = vmatpush.msra.mxu0 0.0
    %1315 = vmatpush.msra.mxu0 0.0
    %1316 = vmatpush.msra.mxu0 0.0
    %1317 = vmatpush.msra.mxu0 0.0
    %1318 = vmatpush.msra.mxu0 0.0
    %1319 = vmatpush.msra.mxu0 0.0
    %1320 = vmatpush.msra.mxu0 0.0
    %1321 = vmatpush.msra.mxu0 0.0
    %1322 = vmatpush.msra.mxu0 0.0
    %1323 = vmatpush.msra.mxu0 0.0
    %1324 = vmatpush.msra.mxu0 %v1311
    %1325 = vmatpush.msra.mxu0 %v1310
    %1326 = vmatpush.msra.mxu0 %v1309
    %1327 = vmatpush.msra.mxu0 %v1308
    %1328 = vmatmul.f32.gmra.mxu0 %v563
    %v1329 = vpop.f32.mrf.mxu0
    %v1330 = vadd.f32 0.0, %v1329
    %1331 = vdwg.mxu0
    %v1332 = vmul.f32 %v1330, 0.03125
    %v1333 = vmul.f32 %v1308, %v1308
    %v1334 = vmul.f32 %v1309, %v1309
    %v1335 = vmul.f32 %v1310, %v1310
    %v1336 = vmul.f32 %v1311, %v1311
    %1337 = vmatpush.msra.mxu0 0.0
    %1338 = vmatpush.msra.mxu0 0.0
    %1339 = vmatpush.msra.mxu0 0.0
    %1340 = vmatpush.msra.mxu0 0.0
    %1341 = vmatpush.msra.mxu0 0.0
    %1342 = vmatpush.msra.mxu0 0.0
    %1343 = vmatpush.msra.mxu0 0.0
    %1344 = vmatpush.msra.mxu0 0.0
    %1345 = vmatpush.msra.mxu0 0.0
    %1346 = vmatpush.msra.mxu0 0.0
    %1347 = vmatpush.msra.mxu0 0.0
    %1348 = vmatpush.msra.mxu0 0.0
    %1349 = vmatpush.msra.mxu0 %v1336
    %1350 = vmatpush.msra.mxu0 %v1335
    %1351 = vmatpush.msra.mxu0 %v1334
    %1352 = vmatpush.msra.mxu0 %v1333
    %1353 = vmatmul.f32.gmra.mxu0 %v563
    %v1354 = vpop.f32.mrf.mxu0
    %v1355 = vadd.f32 0.0, %v1354
    %1356 = vdwg.mxu0
    %v1357 = vmul.f32 %v1355, 0.03125
    %v1358 = vmul.f32 %v1332, %v1332
    %v1359 = vsub.f32 %v1357, %v1358
    %v1360 = vmax.f32 %v1359, 0.0
    %v1361 = vadd.f32 %v1360, 1e-05
    %v1362 = vrsqrt.pop %v1361
    %v1363 = vmul.f32 %v1362, %v1361
    %v1364 = vmul.f32 %v1363, %v1362
    %v1365 = vmul.f32 0.5, %v1364
    %v1366 = vsub.f32 1.5, %v1365
    %v1367 = vmul.f32 %v1362, %v1366
    %vm1368 = vweird.f32 %v1361
    %vm1369 = vweird.f32 %v1362
    %vm1370 = vmor %vm1368, %vm1369
    %v1371 = vsel %vm1370, %v1362, %v1367
    %v1372 = vmul.f32 %v368, %v1371
    %v1373 = vmul.f32 %v1332, %v1372
    %v1374 = vsub.f32 %v369, %v1373
    %v1376 = vperm.slane %v1372, 0
    %v1378 = vmul.f32 %v1308, %v1376
    %v1379 = vmul.f32 %v1309, %v1376
    %v1380 = vmul.f32 %v1310, %v1376
    %v1381 = vmul.f32 %v1311, %v1376
    %v1383 = vperm.slane %v1374, 0
    %v1385 = vadd.f32 %v1378, %v1383
    %v1386 = vadd.f32 %v1379, %v1383
    %v1387 = vadd.f32 %v1380, %v1383
    %v1388 = vadd.f32 %v1381, %v1383
    %v1389 = vmax.f32 %v1385, 0.0
    %v1390 = vmax.f32 %v1386, 0.0
    %v1391 = vmax.f32 %v1387, 0.0
    %v1392 = vmax.f32 %v1388, 0.0
    %v1393 = vrot.slane %v1389, 7
    %v1394 = vrot.slane %v1390, 7
    %v1395 = vrot.slane %v1391, 7
    %v1396 = vrot.slane %v1392, 7
    %v1397 = vsel %vm448, %v1395, %v1396
    %v1398 = vsel %vm448, %v1394, %v1395
    %v1399 = vsel %vm448, %v1393, %v1394
    %v1400 = vsel %vm448, %v1396, %v1393
    %v1401 = vmul.f32 %v1400, %v401
    %v1402 = vmul.f32 %v1399, %v406
    %v1403 = vmul.f32 %v1398, %v411
    %v1404 = vmul.f32 %v1397, %v416
    %v1405 = vrot.slane %v1389, 1
    %v1406 = vrot.slane %v1390, 1
    %v1407 = vrot.slane %v1391, 1
    %v1408 = vrot.slane %v1392, 1
    %v1409 = vsel %vm461, %v1407, %v1408
    %v1410 = vsel %vm461, %v1406, %v1407
    %v1411 = vsel %vm461, %v1405, %v1406
    %v1412 = vsel %vm461, %v1408, %v1405
    %v1413 = vmul.f32 %v1411, %v421
    %v1414 = vmul.f32 %v1410, %v426
    %v1415 = vmul.f32 %v1409, %v431
    %v1416 = vmul.f32 %v1412, %v436
    %1417 = vmatpush.msra.mxu0 %v333
    %1418 = vmatpush.msra.mxu0 %v332
    %1419 = vmatpush.msra.mxu0 %v331
    %1420 = vmatpush.msra.mxu0 %v330
    %1421 = vmatpush.msra.mxu0 %v329
    %1422 = vmatpush.msra.mxu0 %v328
    %1423 = vmatpush.msra.mxu0 %v327
    %1424 = vmatpush.msra.mxu0 %v326
    %1425 = vmatpush.msra.mxu0 %v325
    %1426 = vmatpush.msra.mxu0 %v324
    %1427 = vmatpush.msra.mxu0 %v323
    %1428 = vmatpush.msra.mxu0 %v322
    %1429 = vmatpush.msra.mxu0 %v321
    %1430 = vmatpush.msra.mxu0 %v320
    %1431 = vmatpush.msra.mxu0 %v319
    %1432 = vmatpush.msra.mxu0 %v318
    %1433 = vmatmul.f32.gmra.mxu0 %v1401
    %v1434 = vpop.f32.mrf.mxu0
    %v1435 = vadd.f32 0.0, %v1434
    %1436 = vmatmul.f32.gmra.mxu0 %v1402
    %v1437 = vpop.f32.mrf.mxu0
    %v1438 = vadd.f32 0.0, %v1437
    %1439 = vmatmul.f32.gmra.mxu0 %v1403
    %v1440 = vpop.f32.mrf.mxu0
    %v1441 = vadd.f32 0.0, %v1440
    %1442 = vmatmul.f32.gmra.mxu0 %v1404
    %v1443 = vpop.f32.mrf.mxu0
    %v1444 = vadd.f32 0.0, %v1443
    %1445 = vdwg.mxu0
    %1446 = vmatpush.msra.mxu0 %v349
    %1447 = vmatpush.msra.mxu0 %v348
    %1448 = vmatpush.msra.mxu0 %v347
    %1449 = vmatpush.msra.mxu0 %v346
    %1450 = vmatpush.msra.mxu0 %v345
    %1451 = vmatpush.msra.mxu0 %v344
    %1452 = vmatpush.msra.mxu0 %v343
    %1453 = vmatpush.msra.mxu0 %v342
    %1454 = vmatpush.msra.mxu0 %v341
    %1455 = vmatpush.msra.mxu0 %v340
    %1456 = vmatpush.msra.mxu0 %v339
    %1457 = vmatpush.msra.mxu0 %v338
    %1458 = vmatpush.msra.mxu0 %v337
    %1459 = vmatpush.msra.mxu0 %v336
    %1460 = vmatpush.msra.mxu0 %v335
    %1461 = vmatpush.msra.mxu0 %v334
    %1462 = vmatmul.f32.gmra.mxu0 %v1389
    %v1463 = vpop.f32.mrf.mxu0
    %v1464 = vadd.f32 %v1435, %v1463
    %1465 = vmatmul.f32.gmra.mxu0 %v1390
    %v1466 = vpop.f32.mrf.mxu0
    %v1467 = vadd.f32 %v1438, %v1466
    %1468 = vmatmul.f32.gmra.mxu0 %v1391
    %v1469 = vpop.f32.mrf.mxu0
    %v1470 = vadd.f32 %v1441, %v1469
    %1471 = vmatmul.f32.gmra.mxu0 %v1392
    %v1472 = vpop.f32.mrf.mxu0
    %v1473 = vadd.f32 %v1444, %v1472
    %1474 = vdwg.mxu0
    %1475 = vmatpush.msra.mxu0 %v365
    %1476 = vmatpush.msra.mxu0 %v364
    %1477 = vmatpush.msra.mxu0 %v363
    %1478 = vmatpush.msra.mxu0 %v362
    %1479 = vmatpush.msra.mxu0 %v361
    %1480 = vmatpush.msra.mxu0 %v360
    %1481 = vmatpush.msra.mxu0 %v359
    %1482 = vmatpush.msra.mxu0 %v358
    %1483 = vmatpush.msra.mxu0 %v357
    %1484 = vmatpush.msra.mxu0 %v356
    %1485 = vmatpush.msra.mxu0 %v355
    %1486 = vmatpush.msra.mxu0 %v354
    %1487 = vmatpush.msra.mxu0 %v353
    %1488 = vmatpush.msra.mxu0 %v352
    %1489 = vmatpush.msra.mxu0 %v351
    %1490 = vmatpush.msra.mxu0 %v350
    %1491 = vmatmul.f32.gmra.mxu0 %v1413
    %v1492 = vpop.f32.mrf.mxu0
    %v1493 = vadd.f32 0.0, %v1492
    %1494 = vmatmul.f32.gmra.mxu0 %v1414
    %v1495 = vpop.f32.mrf.mxu0
    %v1496 = vadd.f32 0.0, %v1495
    %1497 = vmatmul.f32.gmra.mxu0 %v1415
    %v1498 = vpop.f32.mrf.mxu0
    %v1499 = vadd.f32 0.0, %v1498
    %1500 = vmatmul.f32.gmra.mxu0 %v1416
    %v1501 = vpop.f32.mrf.mxu0
    %v1502 = vadd.f32 0.0, %v1501
    %1503 = vdwg.mxu0
    %v1504 = vadd.f32 %v1464, %v1493
    %v1505 = vadd.f32 %v1467, %v1496
    %v1506 = vadd.f32 %v1470, %v1499
    %v1507 = vadd.f32 %v1473, %v1502
    %1508 = vmatpush.msra.mxu0 %v385
    %1509 = vmatpush.msra.mxu0 %v384
    %1510 = vmatpush.msra.mxu0 %v383
    %1511 = vmatpush.msra.mxu0 %v382
    %1512 = vmatpush.msra.mxu0 %v381
    %1513 = vmatpush.msra.mxu0 %v380
    %1514 = vmatpush.msra.mxu0 %v379
    %1515 = vmatpush.msra.mxu0 %v378
    %1516 = vmatpush.msra.mxu0 %v377
    %1517 = vmatpush.msra.mxu0 %v376
    %1518 = vmatpush.msra.mxu0 %v375
    %1519 = vmatpush.msra.mxu0 %v374
    %1520 = vmatpush.msra.mxu0 %v373
    %1521 = vmatpush.msra.mxu0 %v372
    %1522 = vmatpush.msra.mxu0 %v371
    %1523 = vmatpush.msra.mxu0 %v370
    %1524 = vmatmul.f32.gmra.mxu0 %v997
    %v1525 = vpop.f32.mrf.mxu0
    %v1526 = vadd.f32 0.0, %v1525
    %1527 = vmatmul.f32.gmra.mxu0 %v998
    %v1528 = vpop.f32.mrf.mxu0
    %v1529 = vadd.f32 0.0, %v1528
    %1530 = vmatmul.f32.gmra.mxu0 %v999
    %v1531 = vpop.f32.mrf.mxu0
    %v1532 = vadd.f32 0.0, %v1531
    %1533 = vmatmul.f32.gmra.mxu0 %v1000
    %v1534 = vpop.f32.mrf.mxu0
    %v1535 = vadd.f32 0.0, %v1534
    %1536 = vdwg.mxu0
    %v1537 = vadd.f32 %v997, %v1526
    %v1538 = vadd.f32 %v998, %v1529
    %v1539 = vadd.f32 %v999, %v1532
    %v1540 = vadd.f32 %v1000, %v1535
    %v1541 = vadd.f32 %v1537, %v1504
    %v1542 = vadd.f32 %v1538, %v1505
    %v1543 = vadd.f32 %v1539, %v1506
    %v1544 = vadd.f32 %v1540, %v1507
    %v1545 = vadd.f32 %v1541, %v995
    %v1546 = vadd.f32 %v1542, %v995
    %v1547 = vadd.f32 %v1543, %v995
    %v1548 = vadd.f32 %v1544, %v995
    %1549 = vst [vmem:[#allocation19] sm:$0xff] %v1545
    %1550 = vst [vmem:[#allocation19 + $0x8] sm:$0xff] %v1546
    %1551 = vst [vmem:[#allocation19 + $0x10] sm:$0xff] %v1547
    %1552 = vst [vmem:[#allocation19 + $0x18] sm:$0xff] %v1548
    // Predicated region
    $region122: #{tpu_custom_call.1} parent=1 // pred_check
      _
    $region123: #{tpu_custom_call.1} parent=1 // pred_check_branch
      %1554 = sbr.rel (0) target = $region125
    $region124: #{tpu_custom_call.1} parent=1 // pred_region
      %1556 = vsyncadd [#allocation4], 0
      %s1557 = sshll.u32 [#allocation19], 4
      %s1558 = int_to_ptr.vmem [resolvable:$true] %s1557
      %s1559 = sshll.u32 %s20, 4
      %s1560 = int_to_ptr.hbm [resolvable:$true] %s1559
      %1565 = dma.vmem_to_hbm [thread:$0]  %s1558, 512, %s1560, [#allocation4], 128, 128, 8
    $region125: #{tpu_custom_call.1} parent=1 // pred_fallthru
      _
    // Predicated region
    $region126: #{tpu_custom_call.1} parent=1 // pred_check
      _
    $region127: #{tpu_custom_call.1} parent=1 // pred_check_branch
      %1567 = sbr.rel (0) target = $region129
    $region128: #{tpu_custom_call.1} parent=1 // pred_region
      %1569 = dma.done [#allocation4], 512
    $region129: #{tpu_custom_call.1} parent=1 // pred_fallthru
      _
    %1570 = vsyncpa [#allocation3], 1
    %1571 = vsyncpa [#allocation6], 1
    %1572 = vsyncpa [#allocation9], 1
    %1573 = vsyncpa [#allocation12], 1
    %1574 = vsyncpa [#allocation15], 1
    %1575 = vsyncpa [#allocation18], 1
    %1576 = vsyncpa [#allocation4], 1

</llo_original>
